<compile_context>
chip_gen: v7x
topology: tpu7x:2x2x1
jax: 0.10.0
libtpu: 0.0.40
codegen_flags: <defaults>
</compile_context>

<pallas_src>
import numpy as np
import jax
import jax.numpy as jnp
from jax.experimental import pallas as pl
from jax.experimental.pallas import tpu as pltpu

# ---------------- configuration ----------------
B, H, W = 2, 16, 16
IN_CHANNELS = 8
OUT_CHANNELS = 8
BN_EPS = 1e-5
DFT_DTYPE = jnp.bfloat16        # DFT matmul operand dtype (f32 accumulation).
                                # Set to jnp.float32 for strict numerical parity.

C1 = OUT_CHANNELS // 2          # FourierUnit channels (4)
C4 = C1 // 4                    # LFU channels per quadrant (1)
S = H * W                       # 256, flattened spatial axis (lanes)
T16 = H * (W // 2 + 1)          # 144 rfft2 bins of the full image
H2, W2 = H // 2, W // 2
T8 = H2 * (W2 // 2 + 1)         # 40 rfft2 bins of a quadrant
RB = B * C1                     # 8   rows of main-path activations (b-major, c-minor)
RB2 = 2 * RB                    # 16  rows of spectral activations ([real; imag])
KIN = B * IN_CHANNELS           # 16
KOUT = B * OUT_CHANNELS         # 16

# packed conv-weight column offsets
CW_W1 = 0
CW_FUL = CW_W1 + KIN
CW_FUR = CW_FUL + RB
CW_LFU = CW_FUR + RB
CW_W2 = CW_LFU + RB2
CW_COLS = CW_W2 + RB

# packed BN-param column offsets
BP_P1 = 0
BP_PFU = BP_P1 + RB
BP_BN1 = BP_PFU + RB2
BP_BNF = BP_BN1 + 2
BP_BNL = BP_BNF + 2
BP_COLS = BP_BNL + 2


# ---------------- host-side DFT / weight preparation ----------------
def _rfft2_mats(h, w):
    """(S, T) real matrices with S=h*w, T=h*(w//2+1): rfft2(x) = x_flat @ (DR + i*DI)."""
    s, wf = h * w, w // 2 + 1
    basis = np.eye(s, dtype=np.float64).reshape(s, h, w)
    spec = np.fft.rfft2(basis, axes=(-2, -1), norm="ortho").reshape(s, h * wf)
    return np.real(spec).astype(np.float32), np.imag(spec).astype(np.float32)


def _irfft2_mats(h, w):
    """(T, S) real matrices: irfft2(ZR + i*ZI, s=(h,w)) = ZR_flat @ IR + ZI_flat @ II."""
    wf = w // 2 + 1
    t = h * wf
    basis = np.eye(t, dtype=np.complex128).reshape(t, h, wf)
    rr = np.fft.irfft2(basis, s=(h, w), axes=(-2, -1), norm="ortho").reshape(t, h * w)
    ii = np.fft.irfft2(1j * basis, s=(h, w), axes=(-2, -1), norm="ortho").reshape(t, h * w)
    return rr.astype(np.float32), ii.astype(np.float32)


def _lfu_mats(h, w):
    """LFU matrices.  `ld` (S, 8*T8) folds the quadrant crop into the forward DFT with
    column blocks ordered (quadrant, re/im); quadrant order [TL, BL, TR, BR] matches
    torch.split over H then W.  irt8/iit8 (T8, S) fold the 2x2 spatial tiling into the
    inverse DFT."""
    h2, w2 = h // 2, w // 2
    dr8, di8 = _rfft2_mats(h2, w2)              # (h2*w2, T8)
    ir8, ii8 = _irfft2_mats(h2, w2)             # (T8, h2*w2)
    s = h * w
    t8 = h2 * (w2 // 2 + 1)
    offs = [(0, 0), (h2, 0), (0, w2), (h2, w2)]                 # TL, BL, TR, BR
    ld = np.zeros((s, 8 * t8), np.float32)
    hh, ww = np.meshgrid(np.arange(h2), np.arange(w2), indexing="ij")
    for q, (ro, co) in enumerate(offs):
        src = ((ro + hh) * w + (co + ww)).reshape(-1)           # full-image flat index
        ld[src, (2 * q) * t8:(2 * q + 1) * t8] = dr8
        ld[src, (2 * q + 1) * t8:(2 * q + 2) * t8] = di8
    hh16, ww16 = np.meshgrid(np.arange(h), np.arange(w), indexing="ij")
    jsmall = ((hh16 % h2) * w2 + (ww16 % w2)).reshape(-1)       # 2x2 tiling map
    tile = np.zeros((h2 * w2, s), np.float32)
    tile[jsmall, np.arange(s)] = 1.0
    return ld, (ir8 @ tile).astype(np.float32), (ii8 @ tile).astype(np.float32)


def build_kernel_inputs(params):
    """Precompute (once, host-side) every operand of the fused kernel."""
    w1 = np.asarray(params["w1"], np.float32)        # (C1, CIN)
    w_fu = np.asarray(params["w_fu"], np.float32)    # (2C1, 2C1), interleaved re/im
    w_lfu = np.asarray(params["w_lfu"], np.float32)  # (2C1, 2C1)
    w2 = np.asarray(params["w2"], np.float32)        # (COUT, C1)
    assert C1 % 4 == 0 and H % 2 == 0 and W % 2 == 0, "LFU needs C1 % 4 == 0, even H/W"

    dr16, di16 = _rfft2_mats(H, W)            # (S, T16)
    ir16, ii16 = _irfft2_mats(H, W)           # (T16, S)
    ld, irt8, iit8 = _lfu_mats(H, W)          # (S, 8*T8), (T8, S), (T8, S)

    # ---- conv weights expanded over the folded batch axis (kron with I_B) ----
    eye_b = np.eye(B, dtype=np.float32)
    w1big = np.kron(eye_b, w1)                                        # (RB, KIN)
    wrr, wri = w_fu[0::2, 0::2], w_fu[0::2, 1::2]
    wir, wii = w_fu[1::2, 0::2], w_fu[1::2, 1::2]
    wfu_l = np.vstack([np.kron(eye_b, wrr), np.kron(eye_b, wir)])     # (RB2, RB)
    wfu_r = np.vstack([np.kron(eye_b, wri), np.kron(eye_b, wii)])     # (RB2, RB)

    # LFU block conv: input rows ordered (quadrant, re/im, batch, channel) to match the
    # in-kernel lane-block -> row concat; output rows ordered ([real; imag], batch, ch).
    wlfu = np.zeros((RB2, 8 * B * C4), np.float32)
    for part_out in range(2):
        for b in range(B):
            for co in range(C1):
                orow = part_out * RB + b * C1 + co
                for q in range(4):
                    for part_in in range(2):
                        for ci in range(C4):
                            irow = (2 * q + part_in) * (B * C4) + b * C4 + ci
                            wlfu[orow, irow] = w_lfu[2 * co + part_out,
                                                     2 * (q * C4 + ci) + part_in]
    w2big = np.kron(eye_b, w2)                                        # (KOUT, RB)

    convw = np.zeros((RB2, CW_COLS), np.float32)
    convw[0:RB, CW_W1:CW_W1 + KIN] = w1big
    convw[:, CW_FUL:CW_FUL + RB] = wfu_l
    convw[:, CW_FUR:CW_FUR + RB] = wfu_r
    convw[:, CW_LFU:CW_LFU + RB2] = wlfu
    convw[0:KOUT, CW_W2:CW_W2 + RB] = w2big

    # ---- BatchNorm params: stat-combine matrices + per-row gamma/beta ----
    p1 = np.kron(np.ones((B, B), np.float32), np.eye(C1, dtype=np.float32))  # (RB, RB)
    pfu = np.kron(np.eye(2, dtype=np.float32), p1)                           # (RB2, RB2)
    g1, b1 = [np.asarray(v, np.float32) for v in params["bn1"]]
    gf, bf = [np.asarray(v, np.float32) for v in params["bn_fu"]]
    gl, bl = [np.asarray(v, np.float32) for v in params["bn_lfu"]]
    bn1gb = np.stack([np.tile(g1, B), np.tile(b1, B)], axis=1)               # (RB, 2)

    def spectral_gb(g, bta):
        rows = [[g[2 * c + part], bta[2 * c + part]]
                for part in range(2) for _b in range(B) for c in range(C1)]
        return np.asarray(rows, np.float32)                                  # (RB2, 2)

    bnp = np.zeros((RB2, BP_COLS), np.float32)
    bnp[0:RB, BP_P1:BP_P1 + RB] = p1
    bnp[:, BP_PFU:BP_PFU + RB2] = pfu
    bnp[0:RB, BP_BN1:BP_BN1 + 2] = bn1gb
    bnp[:, BP_BNF:BP_BNF + 2] = spectral_gb(gf, bf)
    bnp[:, BP_BNL:BP_BNL + 2] = spectral_gb(gl, bl)

    return {
        "convw": jnp.asarray(convw, jnp.float32),
        "bnp": jnp.asarray(bnp, jnp.float32),
        "fwd16": jnp.asarray(np.vstack([dr16, di16]), DFT_DTYPE),   # (2S, T16)
        "ld": jnp.asarray(ld, DFT_DTYPE),                           # (S, 8*T8)
        "inv16": jnp.asarray(np.vstack([ir16, ii16]), DFT_DTYPE),   # (2T16, S)
        "irt8": jnp.asarray(irt8, DFT_DTYPE),                       # (T8, S)
        "iit8": jnp.asarray(iit8, DFT_DTYPE),                       # (T8, S)
    }


# ---------------- the fused Pallas kernel ----------------
def _spectral_transform_kernel(x_ref, convw_ref, bnp_ref, fwd_ref, ld_ref,
                               inv16_ref, irt8_ref, iit8_ref, o_ref):
    f32 = jnp.float32
    cw = convw_ref[...]
    bnp = bnp_ref[...]

    w1b = cw[0:RB, CW_W1:CW_W1 + KIN]            # (RB, KIN)   conv1, kron(I_B, w1)
    wfu_l = cw[:, CW_FUL:CW_FUL + RB]            # (RB2, RB)   [Wrr; Wir] per batch
    wfu_r = cw[:, CW_FUR:CW_FUR + RB]            # (RB2, RB)   [Wri; Wii] per batch
    wlfu = cw[:, CW_LFU:CW_LFU + RB2]            # (RB2, RB2)  LFU block conv
    w2b = cw[0:KOUT, CW_W2:CW_W2 + RB]           # (KOUT, RB)  conv2, kron(I_B, w2)

    p1 = bnp[0:RB, BP_P1:BP_P1 + RB]
    pfu = bnp[:, BP_PFU:BP_PFU + RB2]
    bn1gb = bnp[0:RB, BP_BN1:BP_BN1 + 2]
    bnfgb = bnp[:, BP_BNF:BP_BNF + 2]
    bnlgb = bnp[:, BP_BNL:BP_BNL + 2]

    def bn_relu(y, p, gb, n):
        """Train-mode BatchNorm (biased variance) + ReLU.  `p` sums the per-row lane
        reductions over each channel's batch rows and broadcasts the totals back to
        every row with one tiny matmul; gamma*rsqrt folded into one scale/bias FMA."""
        s1 = jnp.sum(y, axis=1, keepdims=True)
        s2 = jnp.sum(y * y, axis=1, keepdims=True)
        tot = jnp.dot(p, jnp.concatenate([s1, s2], axis=1), preferred_element_type=f32)
        mu = tot[:, 0:1] * (1.0 / n)
        var = tot[:, 1:2] * (1.0 / n) - mu * mu
        scale = gb[:, 0:1] * jax.lax.rsqrt(var + BN_EPS)
        bias = gb[:, 1:2] - mu * scale
        return jnp.maximum(y * scale + bias, 0.0)

    # ---- conv1 (1x1) + BN + ReLU : one matmul, batch folded into rows --------
    y1 = jnp.dot(w1b, x_ref[...], preferred_element_type=f32)          # (RB, S)
    y1 = bn_relu(y1, p1, bn1gb, B * S)
    y1h = y1.astype(DFT_DTYPE)

    # ---- main FourierUnit: rfft2 / block complex conv / BN+ReLU / irfft2 -----
    zr = jnp.dot(y1h, fwd_ref[0:S, :], preferred_element_type=f32)     # (RB, T16)
    zi = jnp.dot(y1h, fwd_ref[S:2 * S, :], preferred_element_type=f32)
    ffu = (jnp.dot(wfu_l, zr, preferred_element_type=f32)
           + jnp.dot(wfu_r, zi, preferred_element_type=f32))           # (RB2, T16) = [FR; FI]
    ffu = bn_relu(ffu, pfu, bnfgb, B * T16)
    fu_out = (jnp.dot(ffu[0:RB, :].astype(DFT_DTYPE), inv16_ref[0:T16, :],
                      preferred_element_type=f32)
              + jnp.dot(ffu[RB:RB2, :].astype(DFT_DTYPE), inv16_ref[T16:2 * T16, :],
                        preferred_element_type=f32))                   # (RB, S)

    # ---- LFU branch: quadrant crop + rfft2 folded into `ld`; 2x2 tiling ------
    #      folded into irt8/iit8; channel/quadrant/re-im mixing is one matmul.
    y1c4 = jnp.concatenate([y1[b * C1:b * C1 + C4, :] for b in range(B)],
                           axis=0).astype(DFT_DTYPE)                   # (B*C4, S)
    zl = jnp.dot(y1c4, ld_ref[...], preferred_element_type=f32)        # (B*C4, 8*T8)
    zin = jnp.concatenate([zl[:, k * T8:(k + 1) * T8] for k in range(8)],
                          axis=0)                                      # (RB2, T8)
    fl = jnp.dot(wlfu, zin, preferred_element_type=f32)                # (RB2, T8) = [FR; FI]
    fl = bn_relu(fl, pfu, bnlgb, B * T8)
    lfu_out = (jnp.dot(fl[0:RB, :].astype(DFT_DTYPE), irt8_ref[...],
                       preferred_element_type=f32)
               + jnp.dot(fl[RB:RB2, :].astype(DFT_DTYPE), iit8_ref[...],
                         preferred_element_type=f32))                  # (RB, S)

    # ---- conv2( conv1_out + fu_out + lfu_out ) : one matmul, lane-dense store -
    s3 = y1 + fu_out + lfu_out
    o_ref[...] = jnp.dot(w2b, s3, preferred_element_type=f32)          # (KOUT, S)


def _full_spec(shape):
    return pl.BlockSpec(shape, lambda i, _nd=len(shape): (0,) * _nd)


# ---------------- wrapper ----------------
def spectral_transform_forward(x_nchw, kp):
    """SpectralTransform forward, NCHW in / NCHW out, one fused Pallas kernel."""
    b, cin, h, w = x_nchw.shape
    x = x_nchw.reshape(b * cin, h * w).astype(jnp.float32)    # batch folded into rows
    args = (x, kp["convw"], kp["bnp"], kp["fwd16"], kp["ld"],
            kp["inv16"], kp["irt8"], kp["iit8"])
    out = pl.pallas_call(
        _spectral_transform_kernel,
        out_shape=jax.ShapeDtypeStruct((KOUT, S), jnp.float32),
        grid=(1,),
        in_specs=[_full_spec(a.shape) for a in args],
        out_specs=_full_spec((KOUT, S)),
        compiler_params=pltpu.CompilerParams(dimension_semantics=("arbitrary",)),
    )(*args)
    return out.reshape(B, OUT_CHANNELS, h, w)


# ---------------- deterministic parameter init (PyTorch layout) ----------------
def init_params(key):
    ks = jax.random.split(key, 4)

    def conv_w(k, co, ci):
        return jax.random.normal(k, (co, ci), jnp.float32) * (2.0 / ci) ** 0.5

    def bn(c):  # PyTorch BatchNorm2d init: weight=1, bias=0
        return (jnp.ones((c,), jnp.float32), jnp.zeros((c,), jnp.float32))

    return {
        "w1": conv_w(ks[0], C1, IN_CHANNELS),     # conv1 (1x1, no bias)
        "w_fu": conv_w(ks[1], 2 * C1, 2 * C1),    # FourierUnit conv (2C -> 2C)
        "w_lfu": conv_w(ks[2], 2 * C1, 2 * C1),   # LFU FourierUnit conv
        "w2": conv_w(ks[3], OUT_CHANNELS, C1),    # conv2 (1x1, no bias)
        "bn1": bn(C1),
        "bn_fu": bn(2 * C1),
        "bn_lfu": bn(2 * C1),
    }


if __name__ == "__main__":
    key = jax.random.PRNGKey(0)
    k_param, k_x = jax.random.split(key)
    params = init_params(k_param)
    kernel_inputs = build_kernel_inputs(params)
    x = jax.random.normal(k_x, (B, IN_CHANNELS, H, W), jnp.float32)

    fwd = jax.jit(spectral_transform_forward)
    out = fwd(x, kernel_inputs)
    jax.block_until_ready(out)

    assert out.shape == (B, OUT_CHANNELS, H, W) and out.dtype == jnp.float32
    assert bool(jnp.all(jnp.isfinite(out)))
    print("KERNEL_OK")
</pallas_src>

<mosaic_0001>
module attributes {stable_mosaic.version = 11 : i64} {
  func.func @_spectral_transform_kernel(%arg0: i32, %arg1: memref<16x256xf32, #tpu.memory_space<vmem>>, %arg2: memref<16x56xf32, #tpu.memory_space<vmem>>, %arg3: memref<16x30xf32, #tpu.memory_space<vmem>>, %arg4: memref<512x144xbf16, #tpu.memory_space<vmem>>, %arg5: memref<256x320xbf16, #tpu.memory_space<vmem>>, %arg6: memref<288x256xbf16, #tpu.memory_space<vmem>>, %arg7: memref<40x256xbf16, #tpu.memory_space<vmem>>, %arg8: memref<40x256xbf16, #tpu.memory_space<vmem>>, %arg9: memref<16x256xf32, #tpu.memory_space<vmem>>) attributes {dimension_semantics = [#tpu.dimension_semantics<arbitrary>], iteration_bounds = array<i64: 1>, scalar_prefetch = 0 : i64, scratch_operands = 0 : i64, tpu.core_type = #tpu.core_type<tc>, window_params = [{pipeline_mode = #tpu.pipeline_mode<synchronous>, transform_indices = @transform_0, window_bounds = array<i64: 16, 256>}, {pipeline_mode = #tpu.pipeline_mode<synchronous>, transform_indices = @transform_1, window_bounds = array<i64: 16, 56>}, {pipeline_mode = #tpu.pipeline_mode<synchronous>, transform_indices = @transform_2, window_bounds = array<i64: 16, 30>}, {pipeline_mode = #tpu.pipeline_mode<synchronous>, transform_indices = @transform_3, window_bounds = array<i64: 512, 144>}, {pipeline_mode = #tpu.pipeline_mode<synchronous>, transform_indices = @transform_4, window_bounds = array<i64: 256, 320>}, {pipeline_mode = #tpu.pipeline_mode<synchronous>, transform_indices = @transform_5, window_bounds = array<i64: 288, 256>}, {pipeline_mode = #tpu.pipeline_mode<synchronous>, transform_indices = @transform_6, window_bounds = array<i64: 40, 256>}, {pipeline_mode = #tpu.pipeline_mode<synchronous>, transform_indices = @transform_7, window_bounds = array<i64: 40, 256>}, {pipeline_mode = #tpu.pipeline_mode<synchronous>, transform_indices = @transform_8, window_bounds = array<i64: 16, 256>}]} {
    %c0 = arith.constant 0 : index
    %c0_0 = arith.constant 0 : index
    %0 = vector.load %arg2[%c0, %c0_0] : memref<16x56xf32, #tpu.memory_space<vmem>>, vector<16x56xf32>
    %c0_1 = arith.constant 0 : index
    %c0_2 = arith.constant 0 : index
    %1 = vector.load %arg3[%c0_1, %c0_2] : memref<16x30xf32, #tpu.memory_space<vmem>>, vector<16x30xf32>
    %2 = vector.extract_strided_slice %0 {offsets = [0, 0], sizes = [8, 16], strides = [1, 1]} : vector<16x56xf32> to vector<8x16xf32>
    %3 = vector.extract_strided_slice %0 {offsets = [0, 16], sizes = [16, 8], strides = [1, 1]} : vector<16x56xf32> to vector<16x8xf32>
    %4 = vector.extract_strided_slice %0 {offsets = [0, 24], sizes = [16, 8], strides = [1, 1]} : vector<16x56xf32> to vector<16x8xf32>
    %5 = vector.extract_strided_slice %0 {offsets = [0, 32], sizes = [16, 16], strides = [1, 1]} : vector<16x56xf32> to vector<16x16xf32>
    %6 = vector.extract_strided_slice %0 {offsets = [0, 48], sizes = [16, 8], strides = [1, 1]} : vector<16x56xf32> to vector<16x8xf32>
    %7 = vector.extract_strided_slice %1 {offsets = [0, 0], sizes = [8, 8], strides = [1, 1]} : vector<16x30xf32> to vector<8x8xf32>
    %8 = vector.extract_strided_slice %1 {offsets = [0, 8], sizes = [16, 16], strides = [1, 1]} : vector<16x30xf32> to vector<16x16xf32>
    %9 = vector.extract_strided_slice %1 {offsets = [0, 24], sizes = [8, 2], strides = [1, 1]} : vector<16x30xf32> to vector<8x2xf32>
    %10 = vector.extract_strided_slice %1 {offsets = [0, 26], sizes = [16, 2], strides = [1, 1]} : vector<16x30xf32> to vector<16x2xf32>
    %11 = vector.extract_strided_slice %1 {offsets = [0, 28], sizes = [16, 2], strides = [1, 1]} : vector<16x30xf32> to vector<16x2xf32>
    %c0_3 = arith.constant 0 : index
    %c0_4 = arith.constant 0 : index
    %12 = vector.load %arg1[%c0_3, %c0_4] : memref<16x256xf32, #tpu.memory_space<vmem>>, vector<16x256xf32>
    %cst = arith.constant dense<0.000000e+00> : vector<8x256xf32>
    %13 = tpu.matmul %2, %12, %cst {dimension_numbers = #tpu.dot_dimension_numbers<[1], [0], [0], [1], [0, 0, 1, 1], [], []>} : vector<8x16xf32>, vector<16x256xf32>, vector<8x256xf32> -> vector<8x256xf32>
    %cst_5 = arith.constant dense<0.000000e+00> : vector<8xf32>
    %14 = vector.multi_reduction <add>, %13, %cst_5 [1] : vector<8x256xf32> to vector<8xf32>
    %15 = vector.shape_cast %14 : vector<8xf32> to vector<8x1xf32>
    %16 = arith.mulf %13, %13 : vector<8x256xf32>
    %cst_6 = arith.constant dense<0.000000e+00> : vector<8xf32>
    %17 = vector.multi_reduction <add>, %16, %cst_6 [1] : vector<8x256xf32> to vector<8xf32>
    %18 = vector.shape_cast %17 : vector<8xf32> to vector<8x1xf32>
    %19 = tpu.concatenate %15, %18 in 1 : vector<8x1xf32>, vector<8x1xf32> -> vector<8x2xf32>
    %cst_7 = arith.constant dense<0.000000e+00> : vector<8x2xf32>
    %20 = tpu.matmul %7, %19, %cst_7 {dimension_numbers = #tpu.dot_dimension_numbers<[1], [0], [0], [1], [0, 0, 1, 1], [], []>} : vector<8x8xf32>, vector<8x2xf32>, vector<8x2xf32> -> vector<8x2xf32>
    %21 = vector.extract_strided_slice %20 {offsets = [0, 0], sizes = [8, 1], strides = [1, 1]} : vector<8x2xf32> to vector<8x1xf32>
    %cst_8 = arith.constant 0.001953125 : f32
    %22 = vector.broadcast %cst_8 : f32 to vector<8x1xf32>
    %23 = arith.mulf %21, %22 : vector<8x1xf32>
    %24 = vector.extract_strided_slice %20 {offsets = [0, 1], sizes = [8, 1], strides = [1, 1]} : vector<8x2xf32> to vector<8x1xf32>
    %cst_9 = arith.constant 0.001953125 : f32
    %25 = vector.broadcast %cst_9 : f32 to vector<8x1xf32>
    %26 = arith.mulf %24, %25 : vector<8x1xf32>
    %27 = arith.mulf %23, %23 : vector<8x1xf32>
    %28 = arith.subf %26, %27 : vector<8x1xf32>
    %29 = vector.extract_strided_slice %9 {offsets = [0, 0], sizes = [8, 1], strides = [1, 1]} : vector<8x2xf32> to vector<8x1xf32>
    %cst_10 = arith.constant 9.99999974E-6 : f32
    %30 = vector.broadcast %cst_10 : f32 to vector<8x1xf32>
    %31 = arith.addf %28, %30 : vector<8x1xf32>
    %32 = math.rsqrt %31 : vector<8x1xf32>
    %33 = arith.mulf %29, %32 : vector<8x1xf32>
    %34 = vector.extract_strided_slice %9 {offsets = [0, 1], sizes = [8, 1], strides = [1, 1]} : vector<8x2xf32> to vector<8x1xf32>
    %35 = arith.mulf %23, %33 : vector<8x1xf32>
    %36 = arith.subf %34, %35 : vector<8x1xf32>
    %37 = vector.broadcast %33 : vector<8x1xf32> to vector<8x256xf32>
    %38 = arith.mulf %13, %37 : vector<8x256xf32>
    %39 = vector.broadcast %36 : vector<8x1xf32> to vector<8x256xf32>
    %40 = arith.addf %38, %39 : vector<8x256xf32>
    %cst_11 = arith.constant 0.000000e+00 : f32
    %41 = vector.broadcast %cst_11 : f32 to vector<8x256xf32>
    %42 = arith.maximumf %40, %41 : vector<8x256xf32>
    %43 = arith.truncf %42 : vector<8x256xf32> to vector<8x256xbf16>
    %c0_12 = arith.constant 0 : index
    %c0_13 = arith.constant 0 : index
    %44 = vector.load %arg4[%c0_12, %c0_13] : memref<512x144xbf16, #tpu.memory_space<vmem>>, vector<256x144xbf16>
    %cst_14 = arith.constant dense<0.000000e+00> : vector<8x144xf32>
    %45 = tpu.matmul %43, %44, %cst_14 {dimension_numbers = #tpu.dot_dimension_numbers<[1], [0], [0], [1], [0, 0, 1, 1], [], []>} : vector<8x256xbf16>, vector<256x144xbf16>, vector<8x144xf32> -> vector<8x144xf32>
    %c256 = arith.constant 256 : index
    %c0_15 = arith.constant 0 : index
    %46 = vector.load %arg4[%c256, %c0_15] : memref<512x144xbf16, #tpu.memory_space<vmem>>, vector<256x144xbf16>
    %cst_16 = arith.constant dense<0.000000e+00> : vector<8x144xf32>
    %47 = tpu.matmul %43, %46, %cst_16 {dimension_numbers = #tpu.dot_dimension_numbers<[1], [0], [0], [1], [0, 0, 1, 1], [], []>} : vector<8x256xbf16>, vector<256x144xbf16>, vector<8x144xf32> -> vector<8x144xf32>
    %cst_17 = arith.constant dense<0.000000e+00> : vector<16x144xf32>
    %48 = tpu.matmul %3, %45, %cst_17 {dimension_numbers = #tpu.dot_dimension_numbers<[1], [0], [0], [1], [0, 0, 1, 1], [], []>} : vector<16x8xf32>, vector<8x144xf32>, vector<16x144xf32> -> vector<16x144xf32>
    %cst_18 = arith.constant dense<0.000000e+00> : vector<16x144xf32>
    %49 = tpu.matmul %4, %47, %cst_18 {dimension_numbers = #tpu.dot_dimension_numbers<[1], [0], [0], [1], [0, 0, 1, 1], [], []>} : vector<16x8xf32>, vector<8x144xf32>, vector<16x144xf32> -> vector<16x144xf32>
    %50 = arith.addf %48, %49 : vector<16x144xf32>
    %cst_19 = arith.constant dense<0.000000e+00> : vector<16xf32>
    %51 = vector.multi_reduction <add>, %50, %cst_19 [1] : vector<16x144xf32> to vector<16xf32>
    %52 = vector.shape_cast %51 : vector<16xf32> to vector<16x1xf32>
    %53 = arith.mulf %50, %50 : vector<16x144xf32>
    %cst_20 = arith.constant dense<0.000000e+00> : vector<16xf32>
    %54 = vector.multi_reduction <add>, %53, %cst_20 [1] : vector<16x144xf32> to vector<16xf32>
    %55 = vector.shape_cast %54 : vector<16xf32> to vector<16x1xf32>
    %56 = tpu.concatenate %52, %55 in 1 : vector<16x1xf32>, vector<16x1xf32> -> vector<16x2xf32>
    %cst_21 = arith.constant dense<0.000000e+00> : vector<16x2xf32>
    %57 = tpu.matmul %8, %56, %cst_21 {dimension_numbers = #tpu.dot_dimension_numbers<[1], [0], [0], [1], [0, 0, 1, 1], [], []>} : vector<16x16xf32>, vector<16x2xf32>, vector<16x2xf32> -> vector<16x2xf32>
    %58 = vector.extract_strided_slice %57 {offsets = [0, 0], sizes = [16, 1], strides = [1, 1]} : vector<16x2xf32> to vector<16x1xf32>
    %cst_22 = arith.constant 0.00347222225 : f32
    %59 = vector.broadcast %cst_22 : f32 to vector<16x1xf32>
    %60 = arith.mulf %58, %59 : vector<16x1xf32>
    %61 = vector.extract_strided_slice %57 {offsets = [0, 1], sizes = [16, 1], strides = [1, 1]} : vector<16x2xf32> to vector<16x1xf32>
    %cst_23 = arith.constant 0.00347222225 : f32
    %62 = vector.broadcast %cst_23 : f32 to vector<16x1xf32>
    %63 = arith.mulf %61, %62 : vector<16x1xf32>
    %64 = arith.mulf %60, %60 : vector<16x1xf32>
    %65 = arith.subf %63, %64 : vector<16x1xf32>
    %66 = vector.extract_strided_slice %10 {offsets = [0, 0], sizes = [16, 1], strides = [1, 1]} : vector<16x2xf32> to vector<16x1xf32>
    %cst_24 = arith.constant 9.99999974E-6 : f32
    %67 = vector.broadcast %cst_24 : f32 to vector<16x1xf32>
    %68 = arith.addf %65, %67 : vector<16x1xf32>
    %69 = math.rsqrt %68 : vector<16x1xf32>
    %70 = arith.mulf %66, %69 : vector<16x1xf32>
    %71 = vector.extract_strided_slice %10 {offsets = [0, 1], sizes = [16, 1], strides = [1, 1]} : vector<16x2xf32> to vector<16x1xf32>
    %72 = arith.mulf %60, %70 : vector<16x1xf32>
    %73 = arith.subf %71, %72 : vector<16x1xf32>
    %74 = vector.broadcast %70 : vector<16x1xf32> to vector<16x144xf32>
    %75 = arith.mulf %50, %74 : vector<16x144xf32>
    %76 = vector.broadcast %73 : vector<16x1xf32> to vector<16x144xf32>
    %77 = arith.addf %75, %76 : vector<16x144xf32>
    %cst_25 = arith.constant 0.000000e+00 : f32
    %78 = vector.broadcast %cst_25 : f32 to vector<16x144xf32>
    %79 = arith.maximumf %77, %78 : vector<16x144xf32>
    %80 = vector.extract_strided_slice %79 {offsets = [0, 0], sizes = [8, 144], strides = [1, 1]} : vector<16x144xf32> to vector<8x144xf32>
    %81 = arith.truncf %80 : vector<8x144xf32> to vector<8x144xbf16>
    %c0_26 = arith.constant 0 : index
    %c0_27 = arith.constant 0 : index
    %82 = vector.load %arg6[%c0_26, %c0_27] : memref<288x256xbf16, #tpu.memory_space<vmem>>, vector<144x256xbf16>
    %cst_28 = arith.constant dense<0.000000e+00> : vector<8x256xf32>
    %83 = tpu.matmul %81, %82, %cst_28 {dimension_numbers = #tpu.dot_dimension_numbers<[1], [0], [0], [1], [0, 0, 1, 1], [], []>} : vector<8x144xbf16>, vector<144x256xbf16>, vector<8x256xf32> -> vector<8x256xf32>
    %84 = vector.extract_strided_slice %79 {offsets = [8, 0], sizes = [8, 144], strides = [1, 1]} : vector<16x144xf32> to vector<8x144xf32>
    %85 = arith.truncf %84 : vector<8x144xf32> to vector<8x144xbf16>
    %c144 = arith.constant 144 : index
    %c0_29 = arith.constant 0 : index
    %86 = vector.load %arg6[%c144, %c0_29] : memref<288x256xbf16, #tpu.memory_space<vmem>>, vector<144x256xbf16>
    %cst_30 = arith.constant dense<0.000000e+00> : vector<8x256xf32>
    %87 = tpu.matmul %85, %86, %cst_30 {dimension_numbers = #tpu.dot_dimension_numbers<[1], [0], [0], [1], [0, 0, 1, 1], [], []>} : vector<8x144xbf16>, vector<144x256xbf16>, vector<8x256xf32> -> vector<8x256xf32>
    %88 = arith.addf %83, %87 : vector<8x256xf32>
    %89 = vector.extract_strided_slice %42 {offsets = [0, 0], sizes = [1, 256], strides = [1, 1]} : vector<8x256xf32> to vector<1x256xf32>
    %90 = vector.extract_strided_slice %42 {offsets = [4, 0], sizes = [1, 256], strides = [1, 1]} : vector<8x256xf32> to vector<1x256xf32>
    %91 = tpu.concatenate %89, %90 in 0 : vector<1x256xf32>, vector<1x256xf32> -> vector<2x256xf32>
    %92 = arith.truncf %91 : vector<2x256xf32> to vector<2x256xbf16>
    %c0_31 = arith.constant 0 : index
    %c0_32 = arith.constant 0 : index
    %93 = vector.load %arg5[%c0_31, %c0_32] : memref<256x320xbf16, #tpu.memory_space<vmem>>, vector<256x320xbf16>
    %cst_33 = arith.constant dense<0.000000e+00> : vector<2x320xf32>
    %94 = tpu.matmul %92, %93, %cst_33 {dimension_numbers = #tpu.dot_dimension_numbers<[1], [0], [0], [1], [0, 0, 1, 1], [], []>} : vector<2x256xbf16>, vector<256x320xbf16>, vector<2x320xf32> -> vector<2x320xf32>
    %95 = vector.extract_strided_slice %94 {offsets = [0, 0], sizes = [2, 40], strides = [1, 1]} : vector<2x320xf32> to vector<2x40xf32>
    %96 = vector.extract_strided_slice %94 {offsets = [0, 40], sizes = [2, 40], strides = [1, 1]} : vector<2x320xf32> to vector<2x40xf32>
    %97 = vector.extract_strided_slice %94 {offsets = [0, 80], sizes = [2, 40], strides = [1, 1]} : vector<2x320xf32> to vector<2x40xf32>
    %98 = vector.extract_strided_slice %94 {offsets = [0, 120], sizes = [2, 40], strides = [1, 1]} : vector<2x320xf32> to vector<2x40xf32>
    %99 = vector.extract_strided_slice %94 {offsets = [0, 160], sizes = [2, 40], strides = [1, 1]} : vector<2x320xf32> to vector<2x40xf32>
    %100 = vector.extract_strided_slice %94 {offsets = [0, 200], sizes = [2, 40], strides = [1, 1]} : vector<2x320xf32> to vector<2x40xf32>
    %101 = vector.extract_strided_slice %94 {offsets = [0, 240], sizes = [2, 40], strides = [1, 1]} : vector<2x320xf32> to vector<2x40xf32>
    %102 = vector.extract_strided_slice %94 {offsets = [0, 280], sizes = [2, 40], strides = [1, 1]} : vector<2x320xf32> to vector<2x40xf32>
    %103 = tpu.concatenate %95, %96, %97, %98, %99, %100, %101, %102 in 0 : vector<2x40xf32>, vector<2x40xf32>, vector<2x40xf32>, vector<2x40xf32>, vector<2x40xf32>, vector<2x40xf32>, vector<2x40xf32>, vector<2x40xf32> -> vector<16x40xf32>
    %cst_34 = arith.constant dense<0.000000e+00> : vector<16x40xf32>
    %104 = tpu.matmul %5, %103, %cst_34 {dimension_numbers = #tpu.dot_dimension_numbers<[1], [0], [0], [1], [0, 0, 1, 1], [], []>} : vector<16x16xf32>, vector<16x40xf32>, vector<16x40xf32> -> vector<16x40xf32>
    %cst_35 = arith.constant dense<0.000000e+00> : vector<16xf32>
    %105 = vector.multi_reduction <add>, %104, %cst_35 [1] : vector<16x40xf32> to vector<16xf32>
    %106 = vector.shape_cast %105 : vector<16xf32> to vector<16x1xf32>
    %107 = arith.mulf %104, %104 : vector<16x40xf32>
    %cst_36 = arith.constant dense<0.000000e+00> : vector<16xf32>
    %108 = vector.multi_reduction <add>, %107, %cst_36 [1] : vector<16x40xf32> to vector<16xf32>
    %109 = vector.shape_cast %108 : vector<16xf32> to vector<16x1xf32>
    %110 = tpu.concatenate %106, %109 in 1 : vector<16x1xf32>, vector<16x1xf32> -> vector<16x2xf32>
    %cst_37 = arith.constant dense<0.000000e+00> : vector<16x2xf32>
    %111 = tpu.matmul %8, %110, %cst_37 {dimension_numbers = #tpu.dot_dimension_numbers<[1], [0], [0], [1], [0, 0, 1, 1], [], []>} : vector<16x16xf32>, vector<16x2xf32>, vector<16x2xf32> -> vector<16x2xf32>
    %112 = vector.extract_strided_slice %111 {offsets = [0, 0], sizes = [16, 1], strides = [1, 1]} : vector<16x2xf32> to vector<16x1xf32>
    %cst_38 = arith.constant 1.250000e-02 : f32
    %113 = vector.broadcast %cst_38 : f32 to vector<16x1xf32>
    %114 = arith.mulf %112, %113 : vector<16x1xf32>
    %115 = vector.extract_strided_slice %111 {offsets = [0, 1], sizes = [16, 1], strides = [1, 1]} : vector<16x2xf32> to vector<16x1xf32>
    %cst_39 = arith.constant 1.250000e-02 : f32
    %116 = vector.broadcast %cst_39 : f32 to vector<16x1xf32>
    %117 = arith.mulf %115, %116 : vector<16x1xf32>
    %118 = arith.mulf %114, %114 : vector<16x1xf32>
    %119 = arith.subf %117, %118 : vector<16x1xf32>
    %120 = vector.extract_strided_slice %11 {offsets = [0, 0], sizes = [16, 1], strides = [1, 1]} : vector<16x2xf32> to vector<16x1xf32>
    %cst_40 = arith.constant 9.99999974E-6 : f32
    %121 = vector.broadcast %cst_40 : f32 to vector<16x1xf32>
    %122 = arith.addf %119, %121 : vector<16x1xf32>
    %123 = math.rsqrt %122 : vector<16x1xf32>
    %124 = arith.mulf %120, %123 : vector<16x1xf32>
    %125 = vector.extract_strided_slice %11 {offsets = [0, 1], sizes = [16, 1], strides = [1, 1]} : vector<16x2xf32> to vector<16x1xf32>
    %126 = arith.mulf %114, %124 : vector<16x1xf32>
    %127 = arith.subf %125, %126 : vector<16x1xf32>
    %128 = vector.broadcast %124 : vector<16x1xf32> to vector<16x40xf32>
    %129 = arith.mulf %104, %128 : vector<16x40xf32>
    %130 = vector.broadcast %127 : vector<16x1xf32> to vector<16x40xf32>
    %131 = arith.addf %129, %130 : vector<16x40xf32>
    %cst_41 = arith.constant 0.000000e+00 : f32
    %132 = vector.broadcast %cst_41 : f32 to vector<16x40xf32>
    %133 = arith.maximumf %131, %132 : vector<16x40xf32>
    %134 = vector.extract_strided_slice %133 {offsets = [0, 0], sizes = [8, 40], strides = [1, 1]} : vector<16x40xf32> to vector<8x40xf32>
    %135 = arith.truncf %134 : vector<8x40xf32> to vector<8x40xbf16>
    %c0_42 = arith.constant 0 : index
    %c0_43 = arith.constant 0 : index
    %136 = vector.load %arg7[%c0_42, %c0_43] : memref<40x256xbf16, #tpu.memory_space<vmem>>, vector<40x256xbf16>
    %cst_44 = arith.constant dense<0.000000e+00> : vector<8x256xf32>
    %137 = tpu.matmul %135, %136, %cst_44 {dimension_numbers = #tpu.dot_dimension_numbers<[1], [0], [0], [1], [0, 0, 1, 1], [], []>} : vector<8x40xbf16>, vector<40x256xbf16>, vector<8x256xf32> -> vector<8x256xf32>
    %138 = vector.extract_strided_slice %133 {offsets = [8, 0], sizes = [8, 40], strides = [1, 1]} : vector<16x40xf32> to vector<8x40xf32>
    %139 = arith.truncf %138 : vector<8x40xf32> to vector<8x40xbf16>
    %c0_45 = arith.constant 0 : index
    %c0_46 = arith.constant 0 : index
    %140 = vector.load %arg8[%c0_45, %c0_46] : memref<40x256xbf16, #tpu.memory_space<vmem>>, vector<40x256xbf16>
    %cst_47 = arith.constant dense<0.000000e+00> : vector<8x256xf32>
    %141 = tpu.matmul %139, %140, %cst_47 {dimension_numbers = #tpu.dot_dimension_numbers<[1], [0], [0], [1], [0, 0, 1, 1], [], []>} : vector<8x40xbf16>, vector<40x256xbf16>, vector<8x256xf32> -> vector<8x256xf32>
    %142 = arith.addf %137, %141 : vector<8x256xf32>
    %143 = arith.addf %42, %88 : vector<8x256xf32>
    %144 = arith.addf %143, %142 : vector<8x256xf32>
    %cst_48 = arith.constant dense<0.000000e+00> : vector<16x256xf32>
    %145 = tpu.matmul %6, %144, %cst_48 {dimension_numbers = #tpu.dot_dimension_numbers<[1], [0], [0], [1], [0, 0, 1, 1], [], []>} : vector<16x8xf32>, vector<8x256xf32>, vector<16x256xf32> -> vector<16x256xf32>
    %c0_49 = arith.constant 0 : index
    %c0_50 = arith.constant 0 : index
    %146 = vector.load %arg9[%c0_49, %c0_50] : memref<16x256xf32, #tpu.memory_space<vmem>>, vector<16x256xf32>
    tpu.vector_store %arg9[%c0_49, %c0_50], %145 {strides = array<i32>} : memref<16x256xf32, #tpu.memory_space<vmem>>, vector<16x256xf32>,
    return
  }
  func.func @transform_0(%arg0: i32) -> (i32, i32) {
    %c0_i32 = arith.constant 0 : i32
    %c0_i32_0 = arith.constant 0 : i32
    %c0_i32_1 = arith.constant 0 : i32
    return %c0_i32, %c0_i32_0 : i32, i32
  }
  func.func @transform_1(%arg0: i32) -> (i32, i32) {
    %c0_i32 = arith.constant 0 : i32
    %c0_i32_0 = arith.constant 0 : i32
    %c0_i32_1 = arith.constant 0 : i32
    return %c0_i32, %c0_i32_0 : i32, i32
  }
  func.func @transform_2(%arg0: i32) -> (i32, i32) {
    %c0_i32 = arith.constant 0 : i32
    %c0_i32_0 = arith.constant 0 : i32
    %c0_i32_1 = arith.constant 0 : i32
    return %c0_i32, %c0_i32_0 : i32, i32
  }
  func.func @transform_3(%arg0: i32) -> (i32, i32) {
    %c0_i32 = arith.constant 0 : i32
    %c0_i32_0 = arith.constant 0 : i32
    %c0_i32_1 = arith.constant 0 : i32
    return %c0_i32, %c0_i32_0 : i32, i32
  }
  func.func @transform_4(%arg0: i32) -> (i32, i32) {
    %c0_i32 = arith.constant 0 : i32
    %c0_i32_0 = arith.constant 0 : i32
    %c0_i32_1 = arith.constant 0 : i32
    return %c0_i32, %c0_i32_0 : i32, i32
  }
  func.func @transform_5(%arg0: i32) -> (i32, i32) {
    %c0_i32 = arith.constant 0 : i32
    %c0_i32_0 = arith.constant 0 : i32
    %c0_i32_1 = arith.constant 0 : i32
    return %c0_i32, %c0_i32_0 : i32, i32
  }
  func.func @transform_6(%arg0: i32) -> (i32, i32) {
    %c0_i32 = arith.constant 0 : i32
    %c0_i32_0 = arith.constant 0 : i32
    %c0_i32_1 = arith.constant 0 : i32
    return %c0_i32, %c0_i32_0 : i32, i32
  }
  func.func @transform_7(%arg0: i32) -> (i32, i32) {
    %c0_i32 = arith.constant 0 : i32
    %c0_i32_0 = arith.constant 0 : i32
    %c0_i32_1 = arith.constant 0 : i32
    return %c0_i32, %c0_i32_0 : i32, i32
  }
  func.func @transform_8(%arg0: i32) -> (i32, i32) {
    %c0_i32 = arith.constant 0 : i32
    %c0_i32_0 = arith.constant 0 : i32
    %c0_i32_1 = arith.constant 0 : i32
    return %c0_i32, %c0_i32_0 : i32, i32
  }
}

</mosaic_0001>

<llo_original>
// kernel: spectral_transform_forward.1
$region0: #{spectral_transform_forward.1}
  #allocation0 [shape = 'u32[]', space=smem, size = 0x4, offset = 0x4, fixed_abs, tag = 'smem constant byte address 0x4 - core index']
  #allocation1 [shape = 'u32[144,128]{1,0:T(1,128)}', space=vmem, size = 0x12000, scoped, tag = 'internal scratch']
  %s0 = inlined_call_operand.vmem [shape: f32[16,256], index: 0, kind: input, shape index: {}]
  %s1 = inlined_call_operand.vmem [shape: f32[16,56], index: 1, kind: input, shape index: {}]
  %s2 = inlined_call_operand.vmem [shape: f32[16,30], index: 2, kind: input, shape index: {}]
  %s3 = inlined_call_operand.vmem [shape: bf16[512,144], index: 3, kind: input, shape index: {}]
  %s4 = inlined_call_operand.vmem [shape: bf16[256,320], index: 4, kind: input, shape index: {}]
  %s5 = inlined_call_operand.vmem [shape: bf16[288,256], index: 5, kind: input, shape index: {}]
  %s6 = inlined_call_operand.vmem [shape: bf16[40,256], index: 6, kind: input, shape index: {}]
  %s7 = inlined_call_operand.vmem [shape: bf16[40,256], index: 7, kind: input, shape index: {}]
  %s8 = inlined_call_operand.vmem [shape: f32[16,256], index: 8, kind: output, shape index: {}]
  %s9 = sld [smem:[#allocation0]]
  $region42: #{spectral_transform_forward.1} parent=0
    _
  %s11 = ssub.s32 1, %s9
  %s12 = scalar_select 0, %s11, %s9
  // Predicated region
  $region2: #{spectral_transform_forward.1} parent=0 // pred_check
    _
  $region3: #{spectral_transform_forward.1} parent=0 // pred_check_branch
    %14 = sbr.rel (0) target = $region5
  $region4: #{spectral_transform_forward.1} parent=0 // pred_region
    _
  $region5: #{spectral_transform_forward.1} parent=0 // pred_fallthru
    _
  // Predicated region
  $region6: #{spectral_transform_forward.1} parent=0 // pred_check
    _
  $region7: #{spectral_transform_forward.1} parent=0 // pred_check_branch
    %16 = sbr.rel (0) target = $region9
  $region8: #{spectral_transform_forward.1} parent=0 // pred_region
    _
  $region9: #{spectral_transform_forward.1} parent=0 // pred_fallthru
    _
  // Predicated region
  $region10: #{spectral_transform_forward.1} parent=0 // pred_check
    _
  $region11: #{spectral_transform_forward.1} parent=0 // pred_check_branch
    %18 = sbr.rel (0) target = $region13
  $region12: #{spectral_transform_forward.1} parent=0 // pred_region
    _
  $region13: #{spectral_transform_forward.1} parent=0 // pred_fallthru
    _
  // Predicated region
  $region14: #{spectral_transform_forward.1} parent=0 // pred_check
    _
  $region15: #{spectral_transform_forward.1} parent=0 // pred_check_branch
    %20 = sbr.rel (0) target = $region17
  $region16: #{spectral_transform_forward.1} parent=0 // pred_region
    _
  $region17: #{spectral_transform_forward.1} parent=0 // pred_fallthru
    _
  // Predicated region
  $region18: #{spectral_transform_forward.1} parent=0 // pred_check
    _
  $region19: #{spectral_transform_forward.1} parent=0 // pred_check_branch
    %22 = sbr.rel (0) target = $region21
  $region20: #{spectral_transform_forward.1} parent=0 // pred_region
    _
  $region21: #{spectral_transform_forward.1} parent=0 // pred_fallthru
    _
  // Predicated region
  $region22: #{spectral_transform_forward.1} parent=0 // pred_check
    _
  $region23: #{spectral_transform_forward.1} parent=0 // pred_check_branch
    %24 = sbr.rel (0) target = $region25
  $region24: #{spectral_transform_forward.1} parent=0 // pred_region
    _
  $region25: #{spectral_transform_forward.1} parent=0 // pred_fallthru
    _
  // Predicated region
  $region26: #{spectral_transform_forward.1} parent=0 // pred_check
    _
  $region27: #{spectral_transform_forward.1} parent=0 // pred_check_branch
    %26 = sbr.rel (0) target = $region29
  $region28: #{spectral_transform_forward.1} parent=0 // pred_region
    _
  $region29: #{spectral_transform_forward.1} parent=0 // pred_fallthru
    _
  // Predicated region
  $region30: #{spectral_transform_forward.1} parent=0 // pred_check
    _
  $region31: #{spectral_transform_forward.1} parent=0 // pred_check_branch
    %28 = sbr.rel (0) target = $region33
  $region32: #{spectral_transform_forward.1} parent=0 // pred_region
    _
  $region33: #{spectral_transform_forward.1} parent=0 // pred_fallthru
    _
  %v30 = vld [vmem:[%s1] sm:$0xff]
  %v31 = vld [vmem:[%s1 + $0x8] sm:$0xff]
  %v32 = vld [vmem:[%s2] sm:$0xff]
  %v33 = vld [vmem:[%s2 + $0x8] sm:$0xff]
  %v34 = vld [vmem:[%s0] sm:$0xff]
  %v35 = vld [vmem:[%s0 + $0x8] sm:$0xff]
  %v36 = vld [vmem:[%s0 + $0x10] sm:$0xff]
  %v37 = vld [vmem:[%s0 + $0x18] sm:$0xff]
  %vm38 = vcmask 130048
  %v40 = vsel %vm38, %v30, 0
  %42 = vmatprep.subr.mxu0 %v35
  %43 = vmatpush1.msra.mxu0 %v34
  %44 = vmatprep.subr.mxu0 %v37
  %45 = vmatpush1.msra.mxu0 %v36
  %46 = vmatprep.subr.mxu0 0.0
  %47 = vmatpush1.msra.mxu0 0.0
  %48 = vmatprep.subr.mxu0 0.0
  %49 = vmatpush1.msra.mxu0 0.0
  %50 = vmatprep.subr.mxu0 0.0
  %51 = vmatpush1.msra.mxu0 0.0
  %52 = vmatprep.subr.mxu0 0.0
  %53 = vmatpush1.msra.mxu0 0.0
  %54 = vmatprep.subr.mxu0 0.0
  %55 = vmatpush1.msra.mxu0 0.0
  %56 = vmatprep.subr.mxu0 0.0
  %57 = vmatpush1.msra.mxu0 0.0
  %58 = vmatprep.subr.mxu0 0.0
  %59 = vmatpush1.msra.mxu0 0.0
  %60 = vmatprep.subr.mxu0 0.0
  %61 = vmatpush1.msra.mxu0 0.0
  %62 = vmatprep.subr.mxu0 0.0
  %63 = vmatpush1.msra.mxu0 0.0
  %64 = vmatprep.subr.mxu0 0.0
  %65 = vmatpush1.msra.mxu0 0.0
  %66 = vmatprep.subr.mxu0 0.0
  %67 = vmatpush1.msra.mxu0 0.0
  %68 = vmatprep.subr.mxu0 0.0
  %69 = vmatpush1.msra.mxu0 0.0
  %70 = vmatprep.subr.mxu0 0.0
  %71 = vmatpush1.msra.mxu0 0.0
  %72 = vmatprep.subr.mxu0 0.0
  %73 = vmatpush1.msra.mxu0 0.0
  %74 = vmatprep.subr.mxu0 0.0
  %75 = vmatpush1.msra.mxu0 0.0
  %76 = vmatprep.subr.mxu0 0.0
  %77 = vmatpush1.msra.mxu0 0.0
  %78 = vmatprep.subr.mxu0 0.0
  %79 = vmatpush1.msra.mxu0 0.0
  %80 = vmatprep.subr.mxu0 0.0
  %81 = vmatpush1.msra.mxu0 0.0
  %82 = vmatprep.subr.mxu0 0.0
  %83 = vmatpush1.msra.mxu0 0.0
  %84 = vmatprep.subr.mxu0 0.0
  %85 = vmatpush1.msra.mxu0 0.0
  %86 = vmatprep.subr.mxu0 0.0
  %87 = vmatpush1.msra.mxu0 0.0
  %88 = vmatprep.subr.mxu0 0.0
  %89 = vmatpush1.msra.mxu0 0.0
  %90 = vmatprep.subr.mxu0 0.0
  %91 = vmatpush1.msra.mxu0 0.0
  %92 = vmatprep.subr.mxu0 0.0
  %93 = vmatpush1.msra.mxu0 0.0
  %94 = vmatprep.subr.mxu0 0.0
  %95 = vmatpush1.msra.mxu0 0.0
  %96 = vmatprep.subr.mxu0 0.0
  %97 = vmatpush1.msra.mxu0 0.0
  %98 = vmatprep.subr.mxu0 0.0
  %99 = vmatpush1.msra.mxu0 0.0
  %100 = vmatprep.subr.mxu0 0.0
  %101 = vmatpush1.msra.mxu0 0.0
  %102 = vmatprep.subr.mxu0 0.0
  %103 = vmatpush1.msra.mxu0 0.0
  %104 = vmatprep.subr.mxu0 0.0
  %105 = vmatpush1.msra.mxu0 0.0
  %106 = vmatprep.mubr.f32.mxu0 0.0
  %107 = vmatmul.mubr.f32.gmra.mrb[0].mxu0 %v40
  %v108 = vpop.f32.mrb[0].mxu0
  %v109 = vadd.f32 0.0, %v108
  %v110 = vpop.f32.mrb[0].mxu0
  %v111 = vadd.f32 0.0, %v110
  %112 = vdwg.mxu0
  %v113 = vadd.f32 %v109, %v111
  %114 = vadd.xlane.f32.xlu0 %v113
  %v115 = vpop.xlane.xlu0 %114
  %v116 = vmul.f32 %v109, %v109
  %v117 = vmul.f32 %v111, %v111
  %v118 = vadd.f32 %v116, %v117
  %119 = vadd.xlane.f32.xlu0 %v118
  %v120 = vpop.xlane.xlu0 %119
  %vm121 = vcmask 7168
  %v122 = vsel %vm121, %v115, %v120
  %vm123 = vcmask 64512
  %v125 = vsel %vm123, %v32, 0
  %127 = vmatprep.subr.mxu0 0.0
  %128 = vmatpush1.msra.mxu0 %v122
  %129 = vmatprep.subr.mxu0 0.0
  %130 = vmatpush1.msra.mxu0 0.0
  %131 = vmatprep.subr.mxu0 0.0
  %132 = vmatpush1.msra.mxu0 0.0
  %133 = vmatprep.subr.mxu0 0.0
  %134 = vmatpush1.msra.mxu0 0.0
  %135 = vmatprep.subr.mxu0 0.0
  %136 = vmatpush1.msra.mxu0 0.0
  %137 = vmatprep.subr.mxu0 0.0
  %138 = vmatpush1.msra.mxu0 0.0
  %139 = vmatprep.subr.mxu0 0.0
  %140 = vmatpush1.msra.mxu0 0.0
  %141 = vmatprep.subr.mxu0 0.0
  %142 = vmatpush1.msra.mxu0 0.0
  %143 = vmatprep.subr.mxu0 0.0
  %144 = vmatpush1.msra.mxu0 0.0
  %145 = vmatprep.subr.mxu0 0.0
  %146 = vmatpush1.msra.mxu0 0.0
  %147 = vmatprep.subr.mxu0 0.0
  %148 = vmatpush1.msra.mxu0 0.0
  %149 = vmatprep.subr.mxu0 0.0
  %150 = vmatpush1.msra.mxu0 0.0
  %151 = vmatprep.subr.mxu0 0.0
  %152 = vmatpush1.msra.mxu0 0.0
  %153 = vmatprep.subr.mxu0 0.0
  %154 = vmatpush1.msra.mxu0 0.0
  %155 = vmatprep.subr.mxu0 0.0
  %156 = vmatpush1.msra.mxu0 0.0
  %157 = vmatprep.subr.mxu0 0.0
  %158 = vmatpush1.msra.mxu0 0.0
  %159 = vmatprep.subr.mxu0 0.0
  %160 = vmatpush1.msra.mxu0 0.0
  %161 = vmatprep.subr.mxu0 0.0
  %162 = vmatpush1.msra.mxu0 0.0
  %163 = vmatprep.subr.mxu0 0.0
  %164 = vmatpush1.msra.mxu0 0.0
  %165 = vmatprep.subr.mxu0 0.0
  %166 = vmatpush1.msra.mxu0 0.0
  %167 = vmatprep.subr.mxu0 0.0
  %168 = vmatpush1.msra.mxu0 0.0
  %169 = vmatprep.subr.mxu0 0.0
  %170 = vmatpush1.msra.mxu0 0.0
  %171 = vmatprep.subr.mxu0 0.0
  %172 = vmatpush1.msra.mxu0 0.0
  %173 = vmatprep.subr.mxu0 0.0
  %174 = vmatpush1.msra.mxu0 0.0
  %175 = vmatprep.subr.mxu0 0.0
  %176 = vmatpush1.msra.mxu0 0.0
  %177 = vmatprep.subr.mxu0 0.0
  %178 = vmatpush1.msra.mxu0 0.0
  %179 = vmatprep.subr.mxu0 0.0
  %180 = vmatpush1.msra.mxu0 0.0
  %181 = vmatprep.subr.mxu0 0.0
  %182 = vmatpush1.msra.mxu0 0.0
  %183 = vmatprep.subr.mxu0 0.0
  %184 = vmatpush1.msra.mxu0 0.0
  %185 = vmatprep.subr.mxu0 0.0
  %186 = vmatpush1.msra.mxu0 0.0
  %187 = vmatprep.subr.mxu0 0.0
  %188 = vmatpush1.msra.mxu0 0.0
  %189 = vmatprep.subr.mxu0 0.0
  %190 = vmatpush1.msra.mxu0 0.0
  %191 = vmatprep.mubr.f32.mxu0 0.0
  %192 = vmatmul.mubr.f32.gmra.mrb[0].mxu0 %v125
  %v193 = vpop.f32.mrb[0].mxu0
  %v194 = vadd.f32 0.0, %v193
  %v195 = vpop.f32.mrb[0].mxu0
  %196 = vdwg.mxu0
  %v197 = vmul.f32 %v194, 0.001953125
  %v198 = vmul.f32 %v197, %v197
  %200 = vrot.lane.b32.xlu0 %v198, 1
  %v201 = vpop.permute.xlu0 %200
  %v203 = vsub.f32 %v197, %v201
  %v204 = vadd.f32 %v203, 1e-05
  %v205 = vrsqrt.pop %v204
  %207 = vrot.lane.b32.xlu0 %v205, 23
  %v208 = vpop.permute.xlu0 %207
  %v210 = vmul.f32 %v32, %v208
  %212 = vrot.lane.b32.xlu0 %v210, 104
  %v213 = vpop.permute.xlu0 %212
  %v215 = vmul.f32 %v197, %v213
  %217 = vrot.lane.b32.xlu0 %v215, 25
  %v218 = vpop.permute.xlu0 %217
  %v220 = vsub.f32 %v32, %v218
  %221 = vset.pattern.permute.xlu0 24
  %222 = vperm.xlu0 %221, %v210
  %v223 = vpop.permute.xlu0 %222
  %v225 = vmul.f32 %v109, %v223
  %v226 = vmul.f32 %v111, %v223
  %228 = vset.pattern.permute.xlu0 25
  %229 = vperm.xlu0 %228, %v220
  %v230 = vpop.permute.xlu0 %229
  %v232 = vadd.f32 %v225, %v230
  %v233 = vadd.f32 %v226, %v230
  %v234 = vmax.f32 %v232, 0.0
  %v235 = vmax.f32 %v233, 0.0
  %v236 = vpack.c.bf16 %v234, %v234
  %v237 = vpack.c.bf16 %v235, %v235
  %v238 = vld [vmem:[%s3] sm:$0xff]
  %v239 = vld [vmem:[%s3 + $0x8] sm:$0xff]
  %v240 = vld [vmem:[%s3 + $0x10] sm:$0xff]
  %v241 = vld [vmem:[%s3 + $0x18] sm:$0xff]
  %v242 = vld [vmem:[%s3 + $0x20] sm:$0xff]
  %v243 = vld [vmem:[%s3 + $0x28] sm:$0xff]
  %v244 = vld [vmem:[%s3 + $0x30] sm:$0xff]
  %v245 = vld [vmem:[%s3 + $0x38] sm:$0xff]
  %v246 = vld [vmem:[%s3 + $0x40] sm:$0xff]
  %v247 = vld [vmem:[%s3 + $0x48] sm:$0xff]
  %v248 = vld [vmem:[%s3 + $0x50] sm:$0xff]
  %v249 = vld [vmem:[%s3 + $0x58] sm:$0xff]
  %v250 = vld [vmem:[%s3 + $0x60] sm:$0xff]
  %v251 = vld [vmem:[%s3 + $0x68] sm:$0xff]
  %v252 = vld [vmem:[%s3 + $0x70] sm:$0xff]
  %v253 = vld [vmem:[%s3 + $0x78] sm:$0xff]
  %v254 = vld [vmem:[%s3 + $0x80] sm:$0xff]
  %v255 = vld [vmem:[%s3 + $0x88] sm:$0xff]
  %v256 = vld [vmem:[%s3 + $0x90] sm:$0xff]
  %v257 = vld [vmem:[%s3 + $0x98] sm:$0xff]
  %v258 = vld [vmem:[%s3 + $0xa0] sm:$0xff]
  %v259 = vld [vmem:[%s3 + $0xa8] sm:$0xff]
  %v260 = vld [vmem:[%s3 + $0xb0] sm:$0xff]
  %v261 = vld [vmem:[%s3 + $0xb8] sm:$0xff]
  %v262 = vld [vmem:[%s3 + $0xc0] sm:$0xff]
  %v263 = vld [vmem:[%s3 + $0xc8] sm:$0xff]
  %v264 = vld [vmem:[%s3 + $0xd0] sm:$0xff]
  %v265 = vld [vmem:[%s3 + $0xd8] sm:$0xff]
  %v266 = vld [vmem:[%s3 + $0xe0] sm:$0xff]
  %v267 = vld [vmem:[%s3 + $0xe8] sm:$0xff]
  %v268 = vld [vmem:[%s3 + $0xf0] sm:$0xff]
  %v269 = vld [vmem:[%s3 + $0xf8] sm:$0xff]
  %v302 = vunpack.c.l.b16 %v238
  %v303 = vunpack.c.h.b16 %v238
  %v304 = vunpack.c.l.b16 %v239
  %v305 = vunpack.c.h.b16 %v239
  %v306 = vunpack.c.l.b16 %v240
  %v307 = vunpack.c.h.b16 %v240
  %v308 = vunpack.c.l.b16 %v241
  %v309 = vunpack.c.h.b16 %v241
  %v310 = vunpack.c.l.b16 %v242
  %v311 = vunpack.c.h.b16 %v242
  %v312 = vunpack.c.l.b16 %v243
  %v313 = vunpack.c.h.b16 %v243
  %v314 = vunpack.c.l.b16 %v244
  %v315 = vunpack.c.h.b16 %v244
  %v316 = vunpack.c.l.b16 %v245
  %v317 = vunpack.c.h.b16 %v245
  %v318 = vunpack.c.l.b16 %v246
  %v319 = vunpack.c.h.b16 %v246
  %v320 = vunpack.c.l.b16 %v247
  %v321 = vunpack.c.h.b16 %v247
  %v322 = vunpack.c.l.b16 %v248
  %v323 = vunpack.c.h.b16 %v248
  %v324 = vunpack.c.l.b16 %v249
  %v325 = vunpack.c.h.b16 %v249
  %v326 = vunpack.c.l.b16 %v250
  %v327 = vunpack.c.h.b16 %v250
  %v328 = vunpack.c.l.b16 %v251
  %v329 = vunpack.c.h.b16 %v251
  %v330 = vunpack.c.l.b16 %v252
  %v331 = vunpack.c.h.b16 %v252
  %v332 = vunpack.c.l.b16 %v253
  %v333 = vunpack.c.h.b16 %v253
  %v334 = vunpack.c.l.b16 %v254
  %v335 = vunpack.c.h.b16 %v254
  %v336 = vunpack.c.l.b16 %v255
  %v337 = vunpack.c.h.b16 %v255
  %v338 = vunpack.c.l.b16 %v256
  %v339 = vunpack.c.h.b16 %v256
  %v340 = vunpack.c.l.b16 %v257
  %v341 = vunpack.c.h.b16 %v257
  %v342 = vunpack.c.l.b16 %v258
  %v343 = vunpack.c.h.b16 %v258
  %v344 = vunpack.c.l.b16 %v259
  %v345 = vunpack.c.h.b16 %v259
  %v346 = vunpack.c.l.b16 %v260
  %v347 = vunpack.c.h.b16 %v260
  %v348 = vunpack.c.l.b16 %v261
  %v349 = vunpack.c.h.b16 %v261
  %v350 = vunpack.c.l.b16 %v262
  %v351 = vunpack.c.h.b16 %v262
  %v352 = vunpack.c.l.b16 %v263
  %v353 = vunpack.c.h.b16 %v263
  %v354 = vunpack.c.l.b16 %v264
  %v355 = vunpack.c.h.b16 %v264
  %v356 = vunpack.c.l.b16 %v265
  %v357 = vunpack.c.h.b16 %v265
  %v358 = vunpack.c.l.b16 %v266
  %v359 = vunpack.c.h.b16 %v266
  %v360 = vunpack.c.l.b16 %v267
  %v361 = vunpack.c.h.b16 %v267
  %v362 = vunpack.c.l.b16 %v268
  %v363 = vunpack.c.h.b16 %v268
  %v364 = vunpack.c.l.b16 %v269
  %v365 = vunpack.c.h.b16 %v269
  %v366 = vpack.c.b16 %v304, %v302
  %v367 = vpack.c.b16 %v305, %v303
  %v368 = vpack.c.b16 %v308, %v306
  %v369 = vpack.c.b16 %v309, %v307
  %v370 = vpack.c.b16 %v312, %v310
  %v371 = vpack.c.b16 %v313, %v311
  %v372 = vpack.c.b16 %v316, %v314
  %v373 = vpack.c.b16 %v317, %v315
  %v374 = vpack.c.b16 %v320, %v318
  %v375 = vpack.c.b16 %v321, %v319
  %v376 = vpack.c.b16 %v324, %v322
  %v377 = vpack.c.b16 %v325, %v323
  %v378 = vpack.c.b16 %v328, %v326
  %v379 = vpack.c.b16 %v329, %v327
  %v380 = vpack.c.b16 %v332, %v330
  %v381 = vpack.c.b16 %v333, %v331
  %v382 = vpack.c.b16 %v336, %v334
  %v383 = vpack.c.b16 %v337, %v335
  %v384 = vpack.c.b16 %v340, %v338
  %v385 = vpack.c.b16 %v341, %v339
  %v386 = vpack.c.b16 %v344, %v342
  %v387 = vpack.c.b16 %v345, %v343
  %v388 = vpack.c.b16 %v348, %v346
  %v389 = vpack.c.b16 %v349, %v347
  %v390 = vpack.c.b16 %v352, %v350
  %v391 = vpack.c.b16 %v353, %v351
  %v392 = vpack.c.b16 %v356, %v354
  %v393 = vpack.c.b16 %v357, %v355
  %v394 = vpack.c.b16 %v360, %v358
  %v395 = vpack.c.b16 %v361, %v359
  %v396 = vpack.c.b16 %v364, %v362
  %v397 = vpack.c.b16 %v365, %v363
  %430 = vmatprep.subr.bf16.mxu0 %v367
  %431 = vmatpush1.bf16.msra.mxu0 %v366
  %432 = vmatprep.subr.bf16.mxu0 %v369
  %433 = vmatpush1.bf16.msra.mxu0 %v368
  %434 = vmatprep.subr.bf16.mxu0 %v371
  %435 = vmatpush1.bf16.msra.mxu0 %v370
  %436 = vmatprep.subr.bf16.mxu0 %v373
  %437 = vmatpush1.bf16.msra.mxu0 %v372
  %438 = vmatprep.subr.bf16.mxu0 %v375
  %439 = vmatpush1.bf16.msra.mxu0 %v374
  %440 = vmatprep.subr.bf16.mxu0 %v377
  %441 = vmatpush1.bf16.msra.mxu0 %v376
  %442 = vmatprep.subr.bf16.mxu0 %v379
  %443 = vmatpush1.bf16.msra.mxu0 %v378
  %444 = vmatprep.subr.bf16.mxu0 %v381
  %445 = vmatpush1.bf16.msra.mxu0 %v380
  %446 = vmatprep.subr.bf16.mxu0 %v383
  %447 = vmatpush1.bf16.msra.mxu0 %v382
  %448 = vmatprep.subr.bf16.mxu0 %v385
  %449 = vmatpush1.bf16.msra.mxu0 %v384
  %450 = vmatprep.subr.bf16.mxu0 %v387
  %451 = vmatpush1.bf16.msra.mxu0 %v386
  %452 = vmatprep.subr.bf16.mxu0 %v389
  %453 = vmatpush1.bf16.msra.mxu0 %v388
  %454 = vmatprep.subr.bf16.mxu0 %v391
  %455 = vmatpush1.bf16.msra.mxu0 %v390
  %456 = vmatprep.subr.bf16.mxu0 %v393
  %457 = vmatpush1.bf16.msra.mxu0 %v392
  %458 = vmatprep.subr.bf16.mxu0 %v395
  %459 = vmatpush1.bf16.msra.mxu0 %v394
  %460 = vmatprep.subr.bf16.mxu0 %v397
  %461 = vmatpush1.bf16.msra.mxu0 %v396
  %462 = vmatprep.mubr.bf16.mxu0 %v237
  %463 = vmatmul.mubr.bf16.gmra.mrb[0].mxu0 %v236
  %v464 = vpop.f32.mrb[0].mxu0
  %v465 = vadd.f32 0.0, %v464
  %v466 = vpop.f32.mrb[0].mxu0
  %v467 = vadd.f32 0.0, %v466
  %v468 = vpop.f32.mrb[0].mxu0
  %v469 = vpop.f32.mrb[0].mxu0
  %470 = vdwg.mxu0
  %v471 = vld [vmem:[%s3 + $0x100] sm:$0xff]
  %v472 = vld [vmem:[%s3 + $0x108] sm:$0xff]
  %v473 = vld [vmem:[%s3 + $0x110] sm:$0xff]
  %v474 = vld [vmem:[%s3 + $0x118] sm:$0xff]
  %v475 = vld [vmem:[%s3 + $0x120] sm:$0xff]
  %v476 = vld [vmem:[%s3 + $0x128] sm:$0xff]
  %v477 = vld [vmem:[%s3 + $0x130] sm:$0xff]
  %v478 = vld [vmem:[%s3 + $0x138] sm:$0xff]
  %v479 = vld [vmem:[%s3 + $0x140] sm:$0xff]
  %v480 = vld [vmem:[%s3 + $0x148] sm:$0xff]
  %v481 = vld [vmem:[%s3 + $0x150] sm:$0xff]
  %v482 = vld [vmem:[%s3 + $0x158] sm:$0xff]
  %v483 = vld [vmem:[%s3 + $0x160] sm:$0xff]
  %v484 = vld [vmem:[%s3 + $0x168] sm:$0xff]
  %v485 = vld [vmem:[%s3 + $0x170] sm:$0xff]
  %v486 = vld [vmem:[%s3 + $0x178] sm:$0xff]
  %v487 = vld [vmem:[%s3 + $0x180] sm:$0xff]
  %v488 = vld [vmem:[%s3 + $0x188] sm:$0xff]
  %v489 = vld [vmem:[%s3 + $0x190] sm:$0xff]
  %v490 = vld [vmem:[%s3 + $0x198] sm:$0xff]
  %v491 = vld [vmem:[%s3 + $0x1a0] sm:$0xff]
  %v492 = vld [vmem:[%s3 + $0x1a8] sm:$0xff]
  %v493 = vld [vmem:[%s3 + $0x1b0] sm:$0xff]
  %v494 = vld [vmem:[%s3 + $0x1b8] sm:$0xff]
  %v495 = vld [vmem:[%s3 + $0x1c0] sm:$0xff]
  %v496 = vld [vmem:[%s3 + $0x1c8] sm:$0xff]
  %v497 = vld [vmem:[%s3 + $0x1d0] sm:$0xff]
  %v498 = vld [vmem:[%s3 + $0x1d8] sm:$0xff]
  %v499 = vld [vmem:[%s3 + $0x1e0] sm:$0xff]
  %v500 = vld [vmem:[%s3 + $0x1e8] sm:$0xff]
  %v501 = vld [vmem:[%s3 + $0x1f0] sm:$0xff]
  %v502 = vld [vmem:[%s3 + $0x1f8] sm:$0xff]
  %v535 = vunpack.c.l.b16 %v471
  %v536 = vunpack.c.h.b16 %v471
  %v537 = vunpack.c.l.b16 %v472
  %v538 = vunpack.c.h.b16 %v472
  %v539 = vunpack.c.l.b16 %v473
  %v540 = vunpack.c.h.b16 %v473
  %v541 = vunpack.c.l.b16 %v474
  %v542 = vunpack.c.h.b16 %v474
  %v543 = vunpack.c.l.b16 %v475
  %v544 = vunpack.c.h.b16 %v475
  %v545 = vunpack.c.l.b16 %v476
  %v546 = vunpack.c.h.b16 %v476
  %v547 = vunpack.c.l.b16 %v477
  %v548 = vunpack.c.h.b16 %v477
  %v549 = vunpack.c.l.b16 %v478
  %v550 = vunpack.c.h.b16 %v478
  %v551 = vunpack.c.l.b16 %v479
  %v552 = vunpack.c.h.b16 %v479
  %v553 = vunpack.c.l.b16 %v480
  %v554 = vunpack.c.h.b16 %v480
  %v555 = vunpack.c.l.b16 %v481
  %v556 = vunpack.c.h.b16 %v481
  %v557 = vunpack.c.l.b16 %v482
  %v558 = vunpack.c.h.b16 %v482
  %v559 = vunpack.c.l.b16 %v483
  %v560 = vunpack.c.h.b16 %v483
  %v561 = vunpack.c.l.b16 %v484
  %v562 = vunpack.c.h.b16 %v484
  %v563 = vunpack.c.l.b16 %v485
  %v564 = vunpack.c.h.b16 %v485
  %v565 = vunpack.c.l.b16 %v486
  %v566 = vunpack.c.h.b16 %v486
  %v567 = vunpack.c.l.b16 %v487
  %v568 = vunpack.c.h.b16 %v487
  %v569 = vunpack.c.l.b16 %v488
  %v570 = vunpack.c.h.b16 %v488
  %v571 = vunpack.c.l.b16 %v489
  %v572 = vunpack.c.h.b16 %v489
  %v573 = vunpack.c.l.b16 %v490
  %v574 = vunpack.c.h.b16 %v490
  %v575 = vunpack.c.l.b16 %v491
  %v576 = vunpack.c.h.b16 %v491
  %v577 = vunpack.c.l.b16 %v492
  %v578 = vunpack.c.h.b16 %v492
  %v579 = vunpack.c.l.b16 %v493
  %v580 = vunpack.c.h.b16 %v493
  %v581 = vunpack.c.l.b16 %v494
  %v582 = vunpack.c.h.b16 %v494
  %v583 = vunpack.c.l.b16 %v495
  %v584 = vunpack.c.h.b16 %v495
  %v585 = vunpack.c.l.b16 %v496
  %v586 = vunpack.c.h.b16 %v496
  %v587 = vunpack.c.l.b16 %v497
  %v588 = vunpack.c.h.b16 %v497
  %v589 = vunpack.c.l.b16 %v498
  %v590 = vunpack.c.h.b16 %v498
  %v591 = vunpack.c.l.b16 %v499
  %v592 = vunpack.c.h.b16 %v499
  %v593 = vunpack.c.l.b16 %v500
  %v594 = vunpack.c.h.b16 %v500
  %v595 = vunpack.c.l.b16 %v501
  %v596 = vunpack.c.h.b16 %v501
  %v597 = vunpack.c.l.b16 %v502
  %v598 = vunpack.c.h.b16 %v502
  %v599 = vpack.c.b16 %v537, %v535
  %v600 = vpack.c.b16 %v538, %v536
  %v601 = vpack.c.b16 %v541, %v539
  %v602 = vpack.c.b16 %v542, %v540
  %v603 = vpack.c.b16 %v545, %v543
  %v604 = vpack.c.b16 %v546, %v544
  %v605 = vpack.c.b16 %v549, %v547
  %v606 = vpack.c.b16 %v550, %v548
  %v607 = vpack.c.b16 %v553, %v551
  %v608 = vpack.c.b16 %v554, %v552
  %v609 = vpack.c.b16 %v557, %v555
  %v610 = vpack.c.b16 %v558, %v556
  %v611 = vpack.c.b16 %v561, %v559
  %v612 = vpack.c.b16 %v562, %v560
  %v613 = vpack.c.b16 %v565, %v563
  %v614 = vpack.c.b16 %v566, %v564
  %v615 = vpack.c.b16 %v569, %v567
  %v616 = vpack.c.b16 %v570, %v568
  %v617 = vpack.c.b16 %v573, %v571
  %v618 = vpack.c.b16 %v574, %v572
  %v619 = vpack.c.b16 %v577, %v575
  %v620 = vpack.c.b16 %v578, %v576
  %v621 = vpack.c.b16 %v581, %v579
  %v622 = vpack.c.b16 %v582, %v580
  %v623 = vpack.c.b16 %v585, %v583
  %v624 = vpack.c.b16 %v586, %v584
  %v625 = vpack.c.b16 %v589, %v587
  %v626 = vpack.c.b16 %v590, %v588
  %v627 = vpack.c.b16 %v593, %v591
  %v628 = vpack.c.b16 %v594, %v592
  %v629 = vpack.c.b16 %v597, %v595
  %v630 = vpack.c.b16 %v598, %v596
  %663 = vmatprep.subr.bf16.mxu0 %v600
  %664 = vmatpush1.bf16.msra.mxu0 %v599
  %665 = vmatprep.subr.bf16.mxu0 %v602
  %666 = vmatpush1.bf16.msra.mxu0 %v601
  %667 = vmatprep.subr.bf16.mxu0 %v604
  %668 = vmatpush1.bf16.msra.mxu0 %v603
  %669 = vmatprep.subr.bf16.mxu0 %v606
  %670 = vmatpush1.bf16.msra.mxu0 %v605
  %671 = vmatprep.subr.bf16.mxu0 %v608
  %672 = vmatpush1.bf16.msra.mxu0 %v607
  %673 = vmatprep.subr.bf16.mxu0 %v610
  %674 = vmatpush1.bf16.msra.mxu0 %v609
  %675 = vmatprep.subr.bf16.mxu0 %v612
  %676 = vmatpush1.bf16.msra.mxu0 %v611
  %677 = vmatprep.subr.bf16.mxu0 %v614
  %678 = vmatpush1.bf16.msra.mxu0 %v613
  %679 = vmatprep.subr.bf16.mxu0 %v616
  %680 = vmatpush1.bf16.msra.mxu0 %v615
  %681 = vmatprep.subr.bf16.mxu0 %v618
  %682 = vmatpush1.bf16.msra.mxu0 %v617
  %683 = vmatprep.subr.bf16.mxu0 %v620
  %684 = vmatpush1.bf16.msra.mxu0 %v619
  %685 = vmatprep.subr.bf16.mxu0 %v622
  %686 = vmatpush1.bf16.msra.mxu0 %v621
  %687 = vmatprep.subr.bf16.mxu0 %v624
  %688 = vmatpush1.bf16.msra.mxu0 %v623
  %689 = vmatprep.subr.bf16.mxu0 %v626
  %690 = vmatpush1.bf16.msra.mxu0 %v625
  %691 = vmatprep.subr.bf16.mxu0 %v628
  %692 = vmatpush1.bf16.msra.mxu0 %v627
  %693 = vmatprep.subr.bf16.mxu0 %v630
  %694 = vmatpush1.bf16.msra.mxu0 %v629
  %695 = vmatprep.mubr.bf16.mxu0 %v237
  %696 = vmatmul.mubr.bf16.gmra.mrb[0].mxu0 %v236
  %v697 = vpop.f32.mrb[0].mxu0
  %v698 = vadd.f32 0.0, %v697
  %v699 = vpop.f32.mrb[0].mxu0
  %v700 = vadd.f32 0.0, %v699
  %v701 = vpop.f32.mrb[0].mxu0
  %v702 = vpop.f32.mrb[0].mxu0
  %703 = vdwg.mxu0
  %705 = vrot.lane.b32.xlu0 %v30, 104
  %v706 = vpop.permute.xlu0 %705
  %707 = vrot.lane.b32.xlu0 %v31, 104
  %v708 = vpop.permute.xlu0 %707
  %v709 = vsel %vm123, %v706, 0
  %v711 = vsel %vm123, %v708, 0
  %713 = vmatprep.subr.mxu0 %v700
  %714 = vmatpush1.msra.mxu0 %v698
  %715 = vmatprep.subr.mxu0 0.0
  %716 = vmatpush1.msra.mxu0 0.0
  %717 = vmatprep.subr.mxu0 0.0
  %718 = vmatpush1.msra.mxu0 0.0
  %719 = vmatprep.subr.mxu0 0.0
  %720 = vmatpush1.msra.mxu0 0.0
  %721 = vmatprep.subr.mxu0 0.0
  %722 = vmatpush1.msra.mxu0 0.0
  %723 = vmatprep.subr.mxu0 0.0
  %724 = vmatpush1.msra.mxu0 0.0
  %725 = vmatprep.subr.mxu0 0.0
  %726 = vmatpush1.msra.mxu0 0.0
  %727 = vmatprep.subr.mxu0 0.0
  %728 = vmatpush1.msra.mxu0 0.0
  %729 = vmatprep.subr.mxu0 0.0
  %730 = vmatpush1.msra.mxu0 0.0
  %731 = vmatprep.subr.mxu0 0.0
  %732 = vmatpush1.msra.mxu0 0.0
  %733 = vmatprep.subr.mxu0 0.0
  %734 = vmatpush1.msra.mxu0 0.0
  %735 = vmatprep.subr.mxu0 0.0
  %736 = vmatpush1.msra.mxu0 0.0
  %737 = vmatprep.subr.mxu0 0.0
  %738 = vmatpush1.msra.mxu0 0.0
  %739 = vmatprep.subr.mxu0 0.0
  %740 = vmatpush1.msra.mxu0 0.0
  %741 = vmatprep.subr.mxu0 0.0
  %742 = vmatpush1.msra.mxu0 0.0
  %743 = vmatprep.subr.mxu0 0.0
  %744 = vmatpush1.msra.mxu0 0.0
  %745 = vmatprep.subr.mxu0 0.0
  %746 = vmatpush1.msra.mxu0 0.0
  %747 = vmatprep.subr.mxu0 0.0
  %748 = vmatpush1.msra.mxu0 0.0
  %749 = vmatprep.subr.mxu0 0.0
  %750 = vmatpush1.msra.mxu0 0.0
  %751 = vmatprep.subr.mxu0 0.0
  %752 = vmatpush1.msra.mxu0 0.0
  %753 = vmatprep.subr.mxu0 0.0
  %754 = vmatpush1.msra.mxu0 0.0
  %755 = vmatprep.subr.mxu0 0.0
  %756 = vmatpush1.msra.mxu0 0.0
  %757 = vmatprep.subr.mxu0 0.0
  %758 = vmatpush1.msra.mxu0 0.0
  %759 = vmatprep.subr.mxu0 0.0
  %760 = vmatpush1.msra.mxu0 0.0
  %761 = vmatprep.subr.mxu0 0.0
  %762 = vmatpush1.msra.mxu0 0.0
  %763 = vmatprep.subr.mxu0 0.0
  %764 = vmatpush1.msra.mxu0 0.0
  %765 = vmatprep.subr.mxu0 0.0
  %766 = vmatpush1.msra.mxu0 0.0
  %767 = vmatprep.subr.mxu0 0.0
  %768 = vmatpush1.msra.mxu0 0.0
  %769 = vmatprep.subr.mxu0 0.0
  %770 = vmatpush1.msra.mxu0 0.0
  %771 = vmatprep.subr.mxu0 0.0
  %772 = vmatpush1.msra.mxu0 0.0
  %773 = vmatprep.subr.mxu0 0.0
  %774 = vmatpush1.msra.mxu0 0.0
  %775 = vmatprep.subr.mxu0 0.0
  %776 = vmatpush1.msra.mxu0 0.0
  %777 = vmatprep.mubr.f32.mxu0 0.0
  %778 = vmatmul.mubr.f32.gmra.mrb[0].mxu0 %v709
  %v779 = vpop.f32.mrb[0].mxu0
  %v780 = vadd.f32 0.0, %v779
  %v781 = vpop.f32.mrb[0].mxu0
  %v782 = vadd.f32 0.0, %v781
  %783 = vmatprep.mubr.f32.mxu0 0.0
  %784 = vmatmul.mubr.f32.gmra.mrb[0].mxu0 %v711
  %v785 = vpop.f32.mrb[0].mxu0
  %v786 = vadd.f32 0.0, %v785
  %v787 = vpop.f32.mrb[0].mxu0
  %v788 = vadd.f32 0.0, %v787
  %789 = vdwg.mxu0
  %790 = vrot.lane.b32.xlu0 %v30, 112
  %v791 = vpop.permute.xlu0 %790
  %792 = vrot.lane.b32.xlu0 %v31, 112
  %v793 = vpop.permute.xlu0 %792
  %v794 = vsel %vm123, %v791, 0
  %v796 = vsel %vm123, %v793, 0
  %798 = vmatprep.subr.mxu0 %v467
  %799 = vmatpush1.msra.mxu0 %v465
  %800 = vmatprep.subr.mxu0 0.0
  %801 = vmatpush1.msra.mxu0 0.0
  %802 = vmatprep.subr.mxu0 0.0
  %803 = vmatpush1.msra.mxu0 0.0
  %804 = vmatprep.subr.mxu0 0.0
  %805 = vmatpush1.msra.mxu0 0.0
  %806 = vmatprep.subr.mxu0 0.0
  %807 = vmatpush1.msra.mxu0 0.0
  %808 = vmatprep.subr.mxu0 0.0
  %809 = vmatpush1.msra.mxu0 0.0
  %810 = vmatprep.subr.mxu0 0.0
  %811 = vmatpush1.msra.mxu0 0.0
  %812 = vmatprep.subr.mxu0 0.0
  %813 = vmatpush1.msra.mxu0 0.0
  %814 = vmatprep.subr.mxu0 0.0
  %815 = vmatpush1.msra.mxu0 0.0
  %816 = vmatprep.subr.mxu0 0.0
  %817 = vmatpush1.msra.mxu0 0.0
  %818 = vmatprep.subr.mxu0 0.0
  %819 = vmatpush1.msra.mxu0 0.0
  %820 = vmatprep.subr.mxu0 0.0
  %821 = vmatpush1.msra.mxu0 0.0
  %822 = vmatprep.subr.mxu0 0.0
  %823 = vmatpush1.msra.mxu0 0.0
  %824 = vmatprep.subr.mxu0 0.0
  %825 = vmatpush1.msra.mxu0 0.0
  %826 = vmatprep.subr.mxu0 0.0
  %827 = vmatpush1.msra.mxu0 0.0
  %828 = vmatprep.subr.mxu0 0.0
  %829 = vmatpush1.msra.mxu0 0.0
  %830 = vmatprep.subr.mxu0 0.0
  %831 = vmatpush1.msra.mxu0 0.0
  %832 = vmatprep.subr.mxu0 0.0
  %833 = vmatpush1.msra.mxu0 0.0
  %834 = vmatprep.subr.mxu0 0.0
  %835 = vmatpush1.msra.mxu0 0.0
  %836 = vmatprep.subr.mxu0 0.0
  %837 = vmatpush1.msra.mxu0 0.0
  %838 = vmatprep.subr.mxu0 0.0
  %839 = vmatpush1.msra.mxu0 0.0
  %840 = vmatprep.subr.mxu0 0.0
  %841 = vmatpush1.msra.mxu0 0.0
  %842 = vmatprep.subr.mxu0 0.0
  %843 = vmatpush1.msra.mxu0 0.0
  %844 = vmatprep.subr.mxu0 0.0
  %845 = vmatpush1.msra.mxu0 0.0
  %846 = vmatprep.subr.mxu0 0.0
  %847 = vmatpush1.msra.mxu0 0.0
  %848 = vmatprep.subr.mxu0 0.0
  %849 = vmatpush1.msra.mxu0 0.0
  %850 = vmatprep.subr.mxu0 0.0
  %851 = vmatpush1.msra.mxu0 0.0
  %852 = vmatprep.subr.mxu0 0.0
  %853 = vmatpush1.msra.mxu0 0.0
  %854 = vmatprep.subr.mxu0 0.0
  %855 = vmatpush1.msra.mxu0 0.0
  %856 = vmatprep.subr.mxu0 0.0
  %857 = vmatpush1.msra.mxu0 0.0
  %858 = vmatprep.subr.mxu0 0.0
  %859 = vmatpush1.msra.mxu0 0.0
  %860 = vmatprep.subr.mxu0 0.0
  %861 = vmatpush1.msra.mxu0 0.0
  %862 = vmatprep.mubr.f32.mxu0 0.0
  %863 = vmatmul.mubr.f32.gmra.mrb[0].mxu0 %v794
  %v864 = vpop.f32.mrb[0].mxu0
  %v865 = vadd.f32 %v780, %v864
  %v866 = vpop.f32.mrb[0].mxu0
  %v867 = vadd.f32 %v782, %v866
  %868 = vmatprep.mubr.f32.mxu0 0.0
  %869 = vmatmul.mubr.f32.gmra.mrb[0].mxu0 %v796
  %v870 = vpop.f32.mrb[0].mxu0
  %v871 = vadd.f32 %v786, %v870
  %v872 = vpop.f32.mrb[0].mxu0
  %v873 = vadd.f32 %v788, %v872
  %874 = vdwg.mxu0
  %v875 = vsel %vm38, %v867, 0.0
  %v876 = vadd.f32 %v865, %v875
  %877 = vadd.xlane.f32.xlu0 %v876
  %v878 = vpop.xlane.xlu0 %877
  %v879 = vsel %vm38, %v873, 0.0
  %v880 = vadd.f32 %v871, %v879
  %881 = vadd.xlane.f32.xlu0 %v880
  %v882 = vpop.xlane.xlu0 %881
  %v883 = vmul.f32 %v865, %v865
  %v884 = vmul.f32 %v867, %v867
  %v885 = vmul.f32 %v871, %v871
  %v886 = vmul.f32 %v873, %v873
  %v887 = vsel %vm38, %v884, 0.0
  %v888 = vadd.f32 %v883, %v887
  %889 = vadd.xlane.f32.xlu0 %v888
  %v890 = vpop.xlane.xlu0 %889
  %v891 = vsel %vm38, %v886, 0.0
  %v892 = vadd.f32 %v885, %v891
  %893 = vadd.xlane.f32.xlu0 %v892
  %v894 = vpop.xlane.xlu0 %893
  %v895 = vsel %vm121, %v878, %v890
  %v896 = vsel %vm121, %v882, %v894
  %898 = vrot.lane.b32.xlu0 %v32, 120
  %v899 = vpop.permute.xlu0 %898
  %900 = vrot.lane.b32.xlu0 %v33, 120
  %v901 = vpop.permute.xlu0 %900
  %v902 = vsel %vm38, %v899, 0
  %v904 = vsel %vm38, %v901, 0
  %906 = vmatprep.subr.mxu0 0.0
  %907 = vmatpush1.msra.mxu0 %v895
  %908 = vmatprep.subr.mxu0 0.0
  %909 = vmatpush1.msra.mxu0 %v896
  %910 = vmatprep.subr.mxu0 0.0
  %911 = vmatpush1.msra.mxu0 0.0
  %912 = vmatprep.subr.mxu0 0.0
  %913 = vmatpush1.msra.mxu0 0.0
  %914 = vmatprep.subr.mxu0 0.0
  %915 = vmatpush1.msra.mxu0 0.0
  %916 = vmatprep.subr.mxu0 0.0
  %917 = vmatpush1.msra.mxu0 0.0
  %918 = vmatprep.subr.mxu0 0.0
  %919 = vmatpush1.msra.mxu0 0.0
  %920 = vmatprep.subr.mxu0 0.0
  %921 = vmatpush1.msra.mxu0 0.0
  %922 = vmatprep.subr.mxu0 0.0
  %923 = vmatpush1.msra.mxu0 0.0
  %924 = vmatprep.subr.mxu0 0.0
  %925 = vmatpush1.msra.mxu0 0.0
  %926 = vmatprep.subr.mxu0 0.0
  %927 = vmatpush1.msra.mxu0 0.0
  %928 = vmatprep.subr.mxu0 0.0
  %929 = vmatpush1.msra.mxu0 0.0
  %930 = vmatprep.subr.mxu0 0.0
  %931 = vmatpush1.msra.mxu0 0.0
  %932 = vmatprep.subr.mxu0 0.0
  %933 = vmatpush1.msra.mxu0 0.0
  %934 = vmatprep.subr.mxu0 0.0
  %935 = vmatpush1.msra.mxu0 0.0
  %936 = vmatprep.subr.mxu0 0.0
  %937 = vmatpush1.msra.mxu0 0.0
  %938 = vmatprep.subr.mxu0 0.0
  %939 = vmatpush1.msra.mxu0 0.0
  %940 = vmatprep.subr.mxu0 0.0
  %941 = vmatpush1.msra.mxu0 0.0
  %942 = vmatprep.subr.mxu0 0.0
  %943 = vmatpush1.msra.mxu0 0.0
  %944 = vmatprep.subr.mxu0 0.0
  %945 = vmatpush1.msra.mxu0 0.0
  %946 = vmatprep.subr.mxu0 0.0
  %947 = vmatpush1.msra.mxu0 0.0
  %948 = vmatprep.subr.mxu0 0.0
  %949 = vmatpush1.msra.mxu0 0.0
  %950 = vmatprep.subr.mxu0 0.0
  %951 = vmatpush1.msra.mxu0 0.0
  %952 = vmatprep.subr.mxu0 0.0
  %953 = vmatpush1.msra.mxu0 0.0
  %954 = vmatprep.subr.mxu0 0.0
  %955 = vmatpush1.msra.mxu0 0.0
  %956 = vmatprep.subr.mxu0 0.0
  %957 = vmatpush1.msra.mxu0 0.0
  %958 = vmatprep.subr.mxu0 0.0
  %959 = vmatpush1.msra.mxu0 0.0
  %960 = vmatprep.subr.mxu0 0.0
  %961 = vmatpush1.msra.mxu0 0.0
  %962 = vmatprep.subr.mxu0 0.0
  %963 = vmatpush1.msra.mxu0 0.0
  %964 = vmatprep.subr.mxu0 0.0
  %965 = vmatpush1.msra.mxu0 0.0
  %966 = vmatprep.subr.mxu0 0.0
  %967 = vmatpush1.msra.mxu0 0.0
  %968 = vmatprep.subr.mxu0 0.0
  %969 = vmatpush1.msra.mxu0 0.0
  %970 = vmatprep.mubr.f32.mxu0 0.0
  %971 = vmatmul.mubr.f32.gmra.mrb[0].mxu0 %v902
  %v972 = vpop.f32.mrb[0].mxu0
  %v973 = vadd.f32 0.0, %v972
  %v974 = vpop.f32.mrb[0].mxu0
  %975 = vmatprep.mubr.f32.mxu0 0.0
  %976 = vmatmul.mubr.f32.gmra.mrb[0].mxu0 %v904
  %v977 = vpop.f32.mrb[0].mxu0
  %v978 = vadd.f32 0.0, %v977
  %v979 = vpop.f32.mrb[0].mxu0
  %980 = vdwg.mxu0
  %v981 = vmul.f32 %v973, 0.0034722222
  %v982 = vmul.f32 %v978, 0.0034722222
  %v983 = vmul.f32 %v981, %v981
  %v984 = vmul.f32 %v982, %v982
  %987 = vrot.lane.b32.xlu0 %v983, 1
  %v988 = vpop.permute.xlu0 %987
  %989 = vrot.lane.b32.xlu0 %v984, 1
  %v990 = vpop.permute.xlu0 %989
  %v993 = vsub.f32 %v981, %v988
  %v994 = vsub.f32 %v982, %v990
  %v995 = vadd.f32 %v993, 1e-05
  %v996 = vadd.f32 %v994, 1e-05
  %v997 = vrsqrt.pop %v995
  %v998 = vrsqrt.pop %v996
  %1001 = vrot.lane.b32.xlu0 %v997, 25
  %v1002 = vpop.permute.xlu0 %1001
  %1003 = vrot.lane.b32.xlu0 %v998, 25
  %v1004 = vpop.permute.xlu0 %1003
  %v1007 = vmul.f32 %v32, %v1002
  %v1008 = vmul.f32 %v33, %v1004
  %1011 = vrot.lane.b32.xlu0 %v1007, 102
  %v1012 = vpop.permute.xlu0 %1011
  %1013 = vrot.lane.b32.xlu0 %v1008, 102
  %v1014 = vpop.permute.xlu0 %1013
  %v1017 = vmul.f32 %v981, %v1012
  %v1018 = vmul.f32 %v982, %v1014
  %1021 = vrot.lane.b32.xlu0 %v1017, 27
  %v1022 = vpop.permute.xlu0 %1021
  %1023 = vrot.lane.b32.xlu0 %v1018, 27
  %v1024 = vpop.permute.xlu0 %1023
  %v1027 = vsub.f32 %v32, %v1022
  %v1028 = vsub.f32 %v33, %v1024
  %1029 = vset.pattern.permute.xlu0 26
  %1030 = vperm.xlu0 %1029, %v1007
  %v1031 = vpop.permute.xlu0 %1030
  %1033 = vset.pattern.permute.xlu0 26
  %1034 = vperm.xlu0 %1033, %v1008
  %v1035 = vpop.permute.xlu0 %1034
  %v1037 = vmul.f32 %v865, %v1031
  %v1038 = vmul.f32 %v867, %v1031
  %v1039 = vmul.f32 %v871, %v1035
  %v1040 = vmul.f32 %v873, %v1035
  %1042 = vset.pattern.permute.xlu0 27
  %1043 = vperm.xlu0 %1042, %v1027
  %v1044 = vpop.permute.xlu0 %1043
  %1047 = vset.pattern.permute.xlu0 27
  %1048 = vperm.xlu0 %1047, %v1028
  %v1049 = vpop.permute.xlu0 %1048
  %v1051 = vadd.f32 %v1037, %v1044
  %v1052 = vadd.f32 %v1038, %v1044
  %v1053 = vadd.f32 %v1039, %v1049
  %v1054 = vadd.f32 %v1040, %v1049
  %v1055 = vmax.f32 %v1051, 0.0
  %v1056 = vmax.f32 %v1052, 0.0
  %v1057 = vmax.f32 %v1053, 0.0
  %v1058 = vmax.f32 %v1054, 0.0
  %v1059 = vpack.c.bf16 %v1055, %v1055
  %v1060 = vpack.c.bf16 %v1056, %v1056
  %v1061 = vld [vmem:[%s5] sm:$0xff]
  %v1062 = vld [vmem:[%s5 + $0x8] sm:$0xff]
  %v1063 = vld [vmem:[%s5 + $0x10] sm:$0xff]
  %v1064 = vld [vmem:[%s5 + $0x18] sm:$0xff]
  %v1065 = vld [vmem:[%s5 + $0x20] sm:$0xff]
  %v1066 = vld [vmem:[%s5 + $0x28] sm:$0xff]
  %v1067 = vld [vmem:[%s5 + $0x30] sm:$0xff]
  %v1068 = vld [vmem:[%s5 + $0x38] sm:$0xff]
  %v1069 = vld [vmem:[%s5 + $0x40] sm:$0xff]
  %v1070 = vld [vmem:[%s5 + $0x48] sm:$0xff]
  %v1071 = vld [vmem:[%s5 + $0x50] sm:$0xff]
  %v1072 = vld [vmem:[%s5 + $0x58] sm:$0xff]
  %v1073 = vld [vmem:[%s5 + $0x60] sm:$0xff]
  %v1074 = vld [vmem:[%s5 + $0x68] sm:$0xff]
  %v1075 = vld [vmem:[%s5 + $0x70] sm:$0xff]
  %v1076 = vld [vmem:[%s5 + $0x78] sm:$0xff]
  %v1077 = vld [vmem:[%s5 + $0x80] sm:$0xff]
  %v1078 = vld [vmem:[%s5 + $0x88] sm:$0xff]
  %v1079 = vpack.c.bf16 %v1057, %v1057
  %v1080 = vpack.c.bf16 %v1058, %v1058
  %v1081 = vld [vmem:[%s5 + $0x90] sm:$0xff]
  %v1082 = vld [vmem:[%s5 + $0x98] sm:$0xff]
  %v1083 = vld [vmem:[%s5 + $0xa0] sm:$0xff]
  %v1084 = vld [vmem:[%s5 + $0xa8] sm:$0xff]
  %v1085 = vld [vmem:[%s5 + $0xb0] sm:$0xff]
  %v1086 = vld [vmem:[%s5 + $0xb8] sm:$0xff]
  %v1087 = vld [vmem:[%s5 + $0xc0] sm:$0xff]
  %v1088 = vld [vmem:[%s5 + $0xc8] sm:$0xff]
  %v1089 = vld [vmem:[%s5 + $0xd0] sm:$0xff]
  %v1090 = vld [vmem:[%s5 + $0xd8] sm:$0xff]
  %v1091 = vld [vmem:[%s5 + $0xe0] sm:$0xff]
  %v1092 = vld [vmem:[%s5 + $0xe8] sm:$0xff]
  %v1093 = vld [vmem:[%s5 + $0xf0] sm:$0xff]
  %v1094 = vld [vmem:[%s5 + $0xf8] sm:$0xff]
  %v1095 = vld [vmem:[%s5 + $0x100] sm:$0xff]
  %v1096 = vld [vmem:[%s5 + $0x108] sm:$0xff]
  %v1097 = vld [vmem:[%s5 + $0x110] sm:$0xff]
  %v1098 = vld [vmem:[%s5 + $0x118] sm:$0xff]
  %v1117 = vunpack.c.l.b16 %v1081
  %v1118 = vunpack.c.h.b16 %v1081
  %v1119 = vunpack.c.l.b16 %v1082
  %v1120 = vunpack.c.h.b16 %v1082
  %v1121 = vunpack.c.l.b16 %v1083
  %v1122 = vunpack.c.h.b16 %v1083
  %v1123 = vunpack.c.l.b16 %v1084
  %v1124 = vunpack.c.h.b16 %v1084
  %v1125 = vunpack.c.l.b16 %v1085
  %v1126 = vunpack.c.h.b16 %v1085
  %v1127 = vunpack.c.l.b16 %v1086
  %v1128 = vunpack.c.h.b16 %v1086
  %v1129 = vunpack.c.l.b16 %v1087
  %v1130 = vunpack.c.h.b16 %v1087
  %v1131 = vunpack.c.l.b16 %v1088
  %v1132 = vunpack.c.h.b16 %v1088
  %v1133 = vunpack.c.l.b16 %v1089
  %v1134 = vunpack.c.h.b16 %v1089
  %v1135 = vunpack.c.l.b16 %v1090
  %v1136 = vunpack.c.h.b16 %v1090
  %v1137 = vunpack.c.l.b16 %v1091
  %v1138 = vunpack.c.h.b16 %v1091
  %v1139 = vunpack.c.l.b16 %v1092
  %v1140 = vunpack.c.h.b16 %v1092
  %v1141 = vunpack.c.l.b16 %v1093
  %v1142 = vunpack.c.h.b16 %v1093
  %v1143 = vunpack.c.l.b16 %v1094
  %v1144 = vunpack.c.h.b16 %v1094
  %v1145 = vunpack.c.l.b16 %v1095
  %v1146 = vunpack.c.h.b16 %v1095
  %v1147 = vunpack.c.l.b16 %v1096
  %v1148 = vunpack.c.h.b16 %v1096
  %v1149 = vunpack.c.l.b16 %v1097
  %v1150 = vunpack.c.h.b16 %v1097
  %v1151 = vunpack.c.l.b16 %v1098
  %v1152 = vunpack.c.h.b16 %v1098
  %v1153 = vpack.c.b16 %v1119, %v1117
  %v1154 = vpack.c.b16 %v1120, %v1118
  %v1155 = vpack.c.b16 %v1123, %v1121
  %v1156 = vpack.c.b16 %v1124, %v1122
  %v1157 = vpack.c.b16 %v1127, %v1125
  %v1158 = vpack.c.b16 %v1128, %v1126
  %v1159 = vpack.c.b16 %v1131, %v1129
  %v1160 = vpack.c.b16 %v1132, %v1130
  %v1161 = vpack.c.b16 %v1135, %v1133
  %v1162 = vpack.c.b16 %v1136, %v1134
  %v1163 = vpack.c.b16 %v1139, %v1137
  %v1164 = vpack.c.b16 %v1140, %v1138
  %v1165 = vpack.c.b16 %v1143, %v1141
  %v1166 = vpack.c.b16 %v1144, %v1142
  %v1167 = vpack.c.b16 %v1147, %v1145
  %v1168 = vpack.c.b16 %v1148, %v1146
  %v1169 = vpack.c.b16 %v1151, %v1149
  %v1170 = vpack.c.b16 %v1152, %v1150
  %v1190 = vsel %vm38, %v1080, 0
  %1192 = vmatprep.subr.bf16.mxu0 %v1154
  %1193 = vmatpush1.bf16.msra.mxu0 %v1153
  %1194 = vmatprep.subr.bf16.mxu0 %v1156
  %1195 = vmatpush1.bf16.msra.mxu0 %v1155
  %1196 = vmatprep.subr.bf16.mxu0 %v1158
  %1197 = vmatpush1.bf16.msra.mxu0 %v1157
  %1198 = vmatprep.subr.bf16.mxu0 %v1160
  %1199 = vmatpush1.bf16.msra.mxu0 %v1159
  %1200 = vmatprep.subr.bf16.mxu0 %v1162
  %1201 = vmatpush1.bf16.msra.mxu0 %v1161
  %1202 = vmatprep.subr.bf16.mxu0 %v1164
  %1203 = vmatpush1.bf16.msra.mxu0 %v1163
  %1204 = vmatprep.subr.bf16.mxu0 %v1166
  %1205 = vmatpush1.bf16.msra.mxu0 %v1165
  %1206 = vmatprep.subr.bf16.mxu0 %v1168
  %1207 = vmatpush1.bf16.msra.mxu0 %v1167
  %1208 = vmatprep.subr.bf16.mxu0 %v1170
  %1209 = vmatpush1.bf16.msra.mxu0 %v1169
  %1210 = vmatprep.subr.bf16.mxu0 0
  %1211 = vmatpush1.bf16.msra.mxu0 0
  %1212 = vmatprep.subr.bf16.mxu0 0
  %1213 = vmatpush1.bf16.msra.mxu0 0
  %1214 = vmatprep.subr.bf16.mxu0 0
  %1215 = vmatpush1.bf16.msra.mxu0 0
  %1216 = vmatprep.subr.bf16.mxu0 0
  %1217 = vmatpush1.bf16.msra.mxu0 0
  %1218 = vmatprep.subr.bf16.mxu0 0
  %1219 = vmatpush1.bf16.msra.mxu0 0
  %1220 = vmatprep.subr.bf16.mxu0 0
  %1221 = vmatpush1.bf16.msra.mxu0 0
  %1222 = vmatprep.subr.bf16.mxu0 0
  %1223 = vmatpush1.bf16.msra.mxu0 0
  %1224 = vmatprep.mubr.bf16.mxu0 %v1190
  %1225 = vmatmul.mubr.bf16.gmra.mrb[0].mxu0 %v1079
  %v1226 = vpop.f32.mrb[0].mxu0
  %v1227 = vadd.f32 0.0, %v1226
  %v1228 = vpop.f32.mrb[0].mxu0
  %v1229 = vadd.f32 0.0, %v1228
  %v1230 = vpop.f32.mrb[0].mxu0
  %v1231 = vpop.f32.mrb[0].mxu0
  %1232 = vdwg.mxu0
  %v1251 = vunpack.c.l.b16 %v1061
  %v1252 = vunpack.c.h.b16 %v1061
  %v1253 = vunpack.c.l.b16 %v1062
  %v1254 = vunpack.c.h.b16 %v1062
  %v1255 = vunpack.c.l.b16 %v1063
  %v1256 = vunpack.c.h.b16 %v1063
  %v1257 = vunpack.c.l.b16 %v1064
  %v1258 = vunpack.c.h.b16 %v1064
  %v1259 = vunpack.c.l.b16 %v1065
  %v1260 = vunpack.c.h.b16 %v1065
  %v1261 = vunpack.c.l.b16 %v1066
  %v1262 = vunpack.c.h.b16 %v1066
  %v1263 = vunpack.c.l.b16 %v1067
  %v1264 = vunpack.c.h.b16 %v1067
  %v1265 = vunpack.c.l.b16 %v1068
  %v1266 = vunpack.c.h.b16 %v1068
  %v1267 = vunpack.c.l.b16 %v1069
  %v1268 = vunpack.c.h.b16 %v1069
  %v1269 = vunpack.c.l.b16 %v1070
  %v1270 = vunpack.c.h.b16 %v1070
  %v1271 = vunpack.c.l.b16 %v1071
  %v1272 = vunpack.c.h.b16 %v1071
  %v1273 = vunpack.c.l.b16 %v1072
  %v1274 = vunpack.c.h.b16 %v1072
  %v1275 = vunpack.c.l.b16 %v1073
  %v1276 = vunpack.c.h.b16 %v1073
  %v1277 = vunpack.c.l.b16 %v1074
  %v1278 = vunpack.c.h.b16 %v1074
  %v1279 = vunpack.c.l.b16 %v1075
  %v1280 = vunpack.c.h.b16 %v1075
  %v1281 = vunpack.c.l.b16 %v1076
  %v1282 = vunpack.c.h.b16 %v1076
  %v1283 = vunpack.c.l.b16 %v1077
  %v1284 = vunpack.c.h.b16 %v1077
  %v1285 = vunpack.c.l.b16 %v1078
  %v1286 = vunpack.c.h.b16 %v1078
  %v1287 = vpack.c.b16 %v1253, %v1251
  %v1288 = vpack.c.b16 %v1254, %v1252
  %v1289 = vpack.c.b16 %v1257, %v1255
  %v1290 = vpack.c.b16 %v1258, %v1256
  %v1291 = vpack.c.b16 %v1261, %v1259
  %v1292 = vpack.c.b16 %v1262, %v1260
  %v1293 = vpack.c.b16 %v1265, %v1263
  %v1294 = vpack.c.b16 %v1266, %v1264
  %v1295 = vpack.c.b16 %v1269, %v1267
  %v1296 = vpack.c.b16 %v1270, %v1268
  %v1297 = vpack.c.b16 %v1273, %v1271
  %v1298 = vpack.c.b16 %v1274, %v1272
  %v1299 = vpack.c.b16 %v1277, %v1275
  %v1300 = vpack.c.b16 %v1278, %v1276
  %v1301 = vpack.c.b16 %v1281, %v1279
  %v1302 = vpack.c.b16 %v1282, %v1280
  %v1303 = vpack.c.b16 %v1285, %v1283
  %v1304 = vpack.c.b16 %v1286, %v1284
  %v1324 = vsel %vm38, %v1060, 0
  %1326 = vmatprep.subr.bf16.mxu0 %v1288
  %1327 = vmatpush1.bf16.msra.mxu0 %v1287
  %1328 = vmatprep.subr.bf16.mxu0 %v1290
  %1329 = vmatpush1.bf16.msra.mxu0 %v1289
  %1330 = vmatprep.subr.bf16.mxu0 %v1292
  %1331 = vmatpush1.bf16.msra.mxu0 %v1291
  %1332 = vmatprep.subr.bf16.mxu0 %v1294
  %1333 = vmatpush1.bf16.msra.mxu0 %v1293
  %1334 = vmatprep.subr.bf16.mxu0 %v1296
  %1335 = vmatpush1.bf16.msra.mxu0 %v1295
  %1336 = vmatprep.subr.bf16.mxu0 %v1298
  %1337 = vmatpush1.bf16.msra.mxu0 %v1297
  %1338 = vmatprep.subr.bf16.mxu0 %v1300
  %1339 = vmatpush1.bf16.msra.mxu0 %v1299
  %1340 = vmatprep.subr.bf16.mxu0 %v1302
  %1341 = vmatpush1.bf16.msra.mxu0 %v1301
  %1342 = vmatprep.subr.bf16.mxu0 %v1304
  %1343 = vmatpush1.bf16.msra.mxu0 %v1303
  %1344 = vmatprep.subr.bf16.mxu0 0
  %1345 = vmatpush1.bf16.msra.mxu0 0
  %1346 = vmatprep.subr.bf16.mxu0 0
  %1347 = vmatpush1.bf16.msra.mxu0 0
  %1348 = vmatprep.subr.bf16.mxu0 0
  %1349 = vmatpush1.bf16.msra.mxu0 0
  %1350 = vmatprep.subr.bf16.mxu0 0
  %1351 = vmatpush1.bf16.msra.mxu0 0
  %1352 = vmatprep.subr.bf16.mxu0 0
  %1353 = vmatpush1.bf16.msra.mxu0 0
  %1354 = vmatprep.subr.bf16.mxu0 0
  %1355 = vmatpush1.bf16.msra.mxu0 0
  %1356 = vmatprep.subr.bf16.mxu0 0
  %1357 = vmatpush1.bf16.msra.mxu0 0
  %1358 = vmatprep.mubr.bf16.mxu0 %v1324
  %1359 = vmatmul.mubr.bf16.gmra.mrb[0].mxu0 %v1059
  %v1360 = vpop.f32.mrb[0].mxu0
  %v1361 = vadd.f32 %v1227, %v1360
  %v1362 = vpop.f32.mrb[0].mxu0
  %v1363 = vadd.f32 %v1229, %v1362
  %v1364 = vpop.f32.mrb[0].mxu0
  %v1365 = vpop.f32.mrb[0].mxu0
  %1366 = vdwg.mxu0
  %v1369 = vrot.slane %v234, 3
  %v1370 = vrot.slane %v235, 3
  %vm1373 = vcmask 1040384
  %v1374 = vsel %vm1373, %v234, %v1369
  %v1375 = vsel %vm1373, %v235, %v1370
  %v1376 = vpack.c.bf16 %v1374, %v1374
  %v1377 = vpack.c.bf16 %v1375, %v1375
  %v1378 = vld [vmem:[%s4] sm:$0xff]
  %v1379 = vld [vmem:[%s4 + $0x8] sm:$0xf]
  %v1380 = vld [vmem:[%s4 + $0xc] sm:$0xff]
  %v1381 = vld [vmem:[%s4 + $0x14] sm:$0xf]
  %v1382 = vld [vmem:[%s4 + $0x18] sm:$0xff]
  %v1383 = vld [vmem:[%s4 + $0x20] sm:$0xf]
  %v1384 = vld [vmem:[%s4 + $0x24] sm:$0xff]
  %v1385 = vld [vmem:[%s4 + $0x2c] sm:$0xf]
  %v1386 = vld [vmem:[%s4 + $0x30] sm:$0xff]
  %v1387 = vld [vmem:[%s4 + $0x38] sm:$0xf]
  %v1388 = vld [vmem:[%s4 + $0x3c] sm:$0xff]
  %v1389 = vld [vmem:[%s4 + $0x44] sm:$0xf]
  %v1390 = vld [vmem:[%s4 + $0x48] sm:$0xff]
  %v1391 = vld [vmem:[%s4 + $0x50] sm:$0xf]
  %v1392 = vld [vmem:[%s4 + $0x54] sm:$0xff]
  %v1393 = vld [vmem:[%s4 + $0x5c] sm:$0xf]
  %v1394 = vld [vmem:[%s4 + $0x60] sm:$0xff]
  %v1395 = vld [vmem:[%s4 + $0x68] sm:$0xf]
  %v1396 = vld [vmem:[%s4 + $0x6c] sm:$0xff]
  %v1397 = vld [vmem:[%s4 + $0x74] sm:$0xf]
  %v1398 = vld [vmem:[%s4 + $0x78] sm:$0xff]
  %v1399 = vld [vmem:[%s4 + $0x80] sm:$0xf]
  %v1400 = vld [vmem:[%s4 + $0x84] sm:$0xff]
  %v1401 = vld [vmem:[%s4 + $0x8c] sm:$0xf]
  %v1402 = vld [vmem:[%s4 + $0x90] sm:$0xff]
  %v1403 = vld [vmem:[%s4 + $0x98] sm:$0xf]
  %v1404 = vld [vmem:[%s4 + $0x9c] sm:$0xff]
  %v1405 = vld [vmem:[%s4 + $0xa4] sm:$0xf]
  %v1406 = vld [vmem:[%s4 + $0xa8] sm:$0xff]
  %v1407 = vld [vmem:[%s4 + $0xb0] sm:$0xf]
  %v1408 = vld [vmem:[%s4 + $0xb4] sm:$0xff]
  %v1409 = vld [vmem:[%s4 + $0xbc] sm:$0xf]
  %v1410 = vld [vmem:[%s4 + $0xc0] sm:$0xff]
  %v1411 = vld [vmem:[%s4 + $0xc8] sm:$0xf]
  %v1412 = vld [vmem:[%s4 + $0xcc] sm:$0xff]
  %v1413 = vld [vmem:[%s4 + $0xd4] sm:$0xf]
  %v1414 = vld [vmem:[%s4 + $0xd8] sm:$0xff]
  %v1415 = vld [vmem:[%s4 + $0xe0] sm:$0xf]
  %v1416 = vld [vmem:[%s4 + $0xe4] sm:$0xff]
  %v1417 = vld [vmem:[%s4 + $0xec] sm:$0xf]
  %v1418 = vld [vmem:[%s4 + $0xf0] sm:$0xff]
  %v1419 = vld [vmem:[%s4 + $0xf8] sm:$0xf]
  %v1420 = vld [vmem:[%s4 + $0xfc] sm:$0xff]
  %v1421 = vld [vmem:[%s4 + $0x104] sm:$0xf]
  %v1422 = vld [vmem:[%s4 + $0x108] sm:$0xff]
  %v1423 = vld [vmem:[%s4 + $0x110] sm:$0xf]
  %v1424 = vld [vmem:[%s4 + $0x114] sm:$0xff]
  %v1425 = vld [vmem:[%s4 + $0x11c] sm:$0xf]
  %v1426 = vld [vmem:[%s4 + $0x120] sm:$0xff]
  %v1427 = vld [vmem:[%s4 + $0x128] sm:$0xf]
  %v1428 = vld [vmem:[%s4 + $0x12c] sm:$0xff]
  %v1429 = vld [vmem:[%s4 + $0x134] sm:$0xf]
  %v1430 = vld [vmem:[%s4 + $0x138] sm:$0xff]
  %v1431 = vld [vmem:[%s4 + $0x140] sm:$0xf]
  %v1432 = vld [vmem:[%s4 + $0x144] sm:$0xff]
  %v1433 = vld [vmem:[%s4 + $0x14c] sm:$0xf]
  %v1434 = vld [vmem:[%s4 + $0x150] sm:$0xff]
  %v1435 = vld [vmem:[%s4 + $0x158] sm:$0xf]
  %v1436 = vld [vmem:[%s4 + $0x15c] sm:$0xff]
  %v1437 = vld [vmem:[%s4 + $0x164] sm:$0xf]
  %v1438 = vld [vmem:[%s4 + $0x168] sm:$0xff]
  %v1439 = vld [vmem:[%s4 + $0x170] sm:$0xf]
  %v1440 = vld [vmem:[%s4 + $0x174] sm:$0xff]
  %v1441 = vld [vmem:[%s4 + $0x17c] sm:$0xf]
  %v1506 = vunpack.c.l.b16 %v1378
  %v1507 = vunpack.c.h.b16 %v1378
  %v1508 = vunpack.c.l.b16 %v1379
  %v1509 = vunpack.c.l.b16 %v1380
  %v1510 = vunpack.c.h.b16 %v1380
  %v1511 = vunpack.c.l.b16 %v1381
  %v1512 = vunpack.c.l.b16 %v1382
  %v1513 = vunpack.c.h.b16 %v1382
  %v1514 = vunpack.c.l.b16 %v1383
  %v1515 = vunpack.c.l.b16 %v1384
  %v1516 = vunpack.c.h.b16 %v1384
  %v1517 = vunpack.c.l.b16 %v1385
  %v1518 = vunpack.c.l.b16 %v1386
  %v1519 = vunpack.c.h.b16 %v1386
  %v1520 = vunpack.c.l.b16 %v1387
  %v1521 = vunpack.c.l.b16 %v1388
  %v1522 = vunpack.c.h.b16 %v1388
  %v1523 = vunpack.c.l.b16 %v1389
  %v1524 = vunpack.c.l.b16 %v1390
  %v1525 = vunpack.c.h.b16 %v1390
  %v1526 = vunpack.c.l.b16 %v1391
  %v1527 = vunpack.c.l.b16 %v1392
  %v1528 = vunpack.c.h.b16 %v1392
  %v1529 = vunpack.c.l.b16 %v1393
  %v1530 = vunpack.c.l.b16 %v1394
  %v1531 = vunpack.c.h.b16 %v1394
  %v1532 = vunpack.c.l.b16 %v1395
  %v1533 = vunpack.c.l.b16 %v1396
  %v1534 = vunpack.c.h.b16 %v1396
  %v1535 = vunpack.c.l.b16 %v1397
  %v1536 = vunpack.c.l.b16 %v1398
  %v1537 = vunpack.c.h.b16 %v1398
  %v1538 = vunpack.c.l.b16 %v1399
  %v1539 = vunpack.c.l.b16 %v1400
  %v1540 = vunpack.c.h.b16 %v1400
  %v1541 = vunpack.c.l.b16 %v1401
  %v1542 = vunpack.c.l.b16 %v1402
  %v1543 = vunpack.c.h.b16 %v1402
  %v1544 = vunpack.c.l.b16 %v1403
  %v1545 = vunpack.c.l.b16 %v1404
  %v1546 = vunpack.c.h.b16 %v1404
  %v1547 = vunpack.c.l.b16 %v1405
  %v1548 = vunpack.c.l.b16 %v1406
  %v1549 = vunpack.c.h.b16 %v1406
  %v1550 = vunpack.c.l.b16 %v1407
  %v1551 = vunpack.c.l.b16 %v1408
  %v1552 = vunpack.c.h.b16 %v1408
  %v1553 = vunpack.c.l.b16 %v1409
  %v1554 = vunpack.c.l.b16 %v1410
  %v1555 = vunpack.c.h.b16 %v1410
  %v1556 = vunpack.c.l.b16 %v1411
  %v1557 = vunpack.c.l.b16 %v1412
  %v1558 = vunpack.c.h.b16 %v1412
  %v1559 = vunpack.c.l.b16 %v1413
  %v1560 = vunpack.c.l.b16 %v1414
  %v1561 = vunpack.c.h.b16 %v1414
  %v1562 = vunpack.c.l.b16 %v1415
  %v1563 = vunpack.c.l.b16 %v1416
  %v1564 = vunpack.c.h.b16 %v1416
  %v1565 = vunpack.c.l.b16 %v1417
  %v1566 = vunpack.c.l.b16 %v1418
  %v1567 = vunpack.c.h.b16 %v1418
  %v1568 = vunpack.c.l.b16 %v1419
  %v1569 = vunpack.c.l.b16 %v1420
  %v1570 = vunpack.c.h.b16 %v1420
  %v1571 = vunpack.c.l.b16 %v1421
  %v1572 = vunpack.c.l.b16 %v1422
  %v1573 = vunpack.c.h.b16 %v1422
  %v1574 = vunpack.c.l.b16 %v1423
  %v1575 = vunpack.c.l.b16 %v1424
  %v1576 = vunpack.c.h.b16 %v1424
  %v1577 = vunpack.c.l.b16 %v1425
  %v1578 = vunpack.c.l.b16 %v1426
  %v1579 = vunpack.c.h.b16 %v1426
  %v1580 = vunpack.c.l.b16 %v1427
  %v1581 = vunpack.c.l.b16 %v1428
  %v1582 = vunpack.c.h.b16 %v1428
  %v1583 = vunpack.c.l.b16 %v1429
  %v1584 = vunpack.c.l.b16 %v1430
  %v1585 = vunpack.c.h.b16 %v1430
  %v1586 = vunpack.c.l.b16 %v1431
  %v1587 = vunpack.c.l.b16 %v1432
  %v1588 = vunpack.c.h.b16 %v1432
  %v1589 = vunpack.c.l.b16 %v1433
  %v1590 = vunpack.c.l.b16 %v1434
  %v1591 = vunpack.c.h.b16 %v1434
  %v1592 = vunpack.c.l.b16 %v1435
  %v1593 = vunpack.c.l.b16 %v1436
  %v1594 = vunpack.c.h.b16 %v1436
  %v1595 = vunpack.c.l.b16 %v1437
  %v1596 = vunpack.c.l.b16 %v1438
  %v1597 = vunpack.c.h.b16 %v1438
  %v1598 = vunpack.c.l.b16 %v1439
  %v1599 = vunpack.c.l.b16 %v1440
  %v1600 = vunpack.c.h.b16 %v1440
  %v1601 = vunpack.c.l.b16 %v1441
  %v1602 = vpack.c.b16 %v1509, %v1506
  %v1603 = vpack.c.b16 %v1510, %v1507
  %v1604 = vpack.c.b16 %v1511, %v1508
  %v1605 = vpack.c.b16 %v1515, %v1512
  %v1606 = vpack.c.b16 %v1516, %v1513
  %v1607 = vpack.c.b16 %v1517, %v1514
  %v1608 = vpack.c.b16 %v1521, %v1518
  %v1609 = vpack.c.b16 %v1522, %v1519
  %v1610 = vpack.c.b16 %v1523, %v1520
  %v1611 = vpack.c.b16 %v1527, %v1524
  %v1612 = vpack.c.b16 %v1528, %v1525
  %v1613 = vpack.c.b16 %v1529, %v1526
  %v1614 = vpack.c.b16 %v1533, %v1530
  %v1615 = vpack.c.b16 %v1534, %v1531
  %v1616 = vpack.c.b16 %v1535, %v1532
  %v1617 = vpack.c.b16 %v1539, %v1536
  %v1618 = vpack.c.b16 %v1540, %v1537
  %v1619 = vpack.c.b16 %v1541, %v1538
  %v1620 = vpack.c.b16 %v1545, %v1542
  %v1621 = vpack.c.b16 %v1546, %v1543
  %v1622 = vpack.c.b16 %v1547, %v1544
  %v1623 = vpack.c.b16 %v1551, %v1548
  %v1624 = vpack.c.b16 %v1552, %v1549
  %v1625 = vpack.c.b16 %v1553, %v1550
  %v1626 = vpack.c.b16 %v1557, %v1554
  %v1627 = vpack.c.b16 %v1558, %v1555
  %v1628 = vpack.c.b16 %v1559, %v1556
  %v1629 = vpack.c.b16 %v1563, %v1560
  %v1630 = vpack.c.b16 %v1564, %v1561
  %v1631 = vpack.c.b16 %v1565, %v1562
  %v1632 = vpack.c.b16 %v1569, %v1566
  %v1633 = vpack.c.b16 %v1570, %v1567
  %v1634 = vpack.c.b16 %v1571, %v1568
  %v1635 = vpack.c.b16 %v1575, %v1572
  %v1636 = vpack.c.b16 %v1576, %v1573
  %v1637 = vpack.c.b16 %v1577, %v1574
  %v1638 = vpack.c.b16 %v1581, %v1578
  %v1639 = vpack.c.b16 %v1582, %v1579
  %v1640 = vpack.c.b16 %v1583, %v1580
  %v1641 = vpack.c.b16 %v1587, %v1584
  %v1642 = vpack.c.b16 %v1588, %v1585
  %v1643 = vpack.c.b16 %v1589, %v1586
  %v1644 = vpack.c.b16 %v1593, %v1590
  %v1645 = vpack.c.b16 %v1594, %v1591
  %v1646 = vpack.c.b16 %v1595, %v1592
  %v1647 = vpack.c.b16 %v1599, %v1596
  %v1648 = vpack.c.b16 %v1600, %v1597
  %v1649 = vpack.c.b16 %v1601, %v1598
  %1698 = vmatprep.subr.bf16.mxu0 %v1603
  %1699 = vmatpush1.bf16.msra.mxu0 %v1602
  %1700 = vmatprep.subr.bf16.mxu0 %v1606
  %1701 = vmatpush1.bf16.msra.mxu0 %v1605
  %1702 = vmatprep.subr.bf16.mxu0 %v1609
  %1703 = vmatpush1.bf16.msra.mxu0 %v1608
  %1704 = vmatprep.subr.bf16.mxu0 %v1612
  %1705 = vmatpush1.bf16.msra.mxu0 %v1611
  %1706 = vmatprep.subr.bf16.mxu0 %v1615
  %1707 = vmatpush1.bf16.msra.mxu0 %v1614
  %1708 = vmatprep.subr.bf16.mxu0 %v1618
  %1709 = vmatpush1.bf16.msra.mxu0 %v1617
  %1710 = vmatprep.subr.bf16.mxu0 %v1621
  %1711 = vmatpush1.bf16.msra.mxu0 %v1620
  %1712 = vmatprep.subr.bf16.mxu0 %v1624
  %1713 = vmatpush1.bf16.msra.mxu0 %v1623
  %1714 = vmatprep.subr.bf16.mxu0 %v1627
  %1715 = vmatpush1.bf16.msra.mxu0 %v1626
  %1716 = vmatprep.subr.bf16.mxu0 %v1630
  %1717 = vmatpush1.bf16.msra.mxu0 %v1629
  %1718 = vmatprep.subr.bf16.mxu0 %v1633
  %1719 = vmatpush1.bf16.msra.mxu0 %v1632
  %1720 = vmatprep.subr.bf16.mxu0 %v1636
  %1721 = vmatpush1.bf16.msra.mxu0 %v1635
  %1722 = vmatprep.subr.bf16.mxu0 %v1639
  %1723 = vmatpush1.bf16.msra.mxu0 %v1638
  %1724 = vmatprep.subr.bf16.mxu0 %v1642
  %1725 = vmatpush1.bf16.msra.mxu0 %v1641
  %1726 = vmatprep.subr.bf16.mxu0 %v1645
  %1727 = vmatpush1.bf16.msra.mxu0 %v1644
  %1728 = vmatprep.subr.bf16.mxu0 %v1648
  %1729 = vmatpush1.bf16.msra.mxu0 %v1647
  %1730 = vmatprep.mubr.bf16.mxu0 %v1377
  %1731 = vmatmul.mubr.bf16.gmra.mrb[0].mxu0 %v1376
  %v1732 = vpop.f32.mrb[0].mxu0
  %v1733 = vadd.f32 0.0, %v1732
  %v1734 = vpop.f32.mrb[0].mxu0
  %v1735 = vadd.f32 0.0, %v1734
  %v1736 = vpop.f32.mrb[0].mxu0
  %v1737 = vpop.f32.mrb[0].mxu0
  %1738 = vdwg.mxu0
  %1739 = vmatprep.subr.bf16.mxu0 0
  %1740 = vmatpush1.bf16.msra.mxu0 %v1604
  %1741 = vmatprep.subr.bf16.mxu0 0
  %1742 = vmatpush1.bf16.msra.mxu0 %v1607
  %1743 = vmatprep.subr.bf16.mxu0 0
  %1744 = vmatpush1.bf16.msra.mxu0 %v1610
  %1745 = vmatprep.subr.bf16.mxu0 0
  %1746 = vmatpush1.bf16.msra.mxu0 %v1613
  %1747 = vmatprep.subr.bf16.mxu0 0
  %1748 = vmatpush1.bf16.msra.mxu0 %v1616
  %1749 = vmatprep.subr.bf16.mxu0 0
  %1750 = vmatpush1.bf16.msra.mxu0 %v1619
  %1751 = vmatprep.subr.bf16.mxu0 0
  %1752 = vmatpush1.bf16.msra.mxu0 %v1622
  %1753 = vmatprep.subr.bf16.mxu0 0
  %1754 = vmatpush1.bf16.msra.mxu0 %v1625
  %1755 = vmatprep.subr.bf16.mxu0 0
  %1756 = vmatpush1.bf16.msra.mxu0 %v1628
  %1757 = vmatprep.subr.bf16.mxu0 0
  %1758 = vmatpush1.bf16.msra.mxu0 %v1631
  %1759 = vmatprep.subr.bf16.mxu0 0
  %1760 = vmatpush1.bf16.msra.mxu0 %v1634
  %1761 = vmatprep.subr.bf16.mxu0 0
  %1762 = vmatpush1.bf16.msra.mxu0 %v1637
  %1763 = vmatprep.subr.bf16.mxu0 0
  %1764 = vmatpush1.bf16.msra.mxu0 %v1640
  %1765 = vmatprep.subr.bf16.mxu0 0
  %1766 = vmatpush1.bf16.msra.mxu0 %v1643
  %1767 = vmatprep.subr.bf16.mxu0 0
  %1768 = vmatpush1.bf16.msra.mxu0 %v1646
  %1769 = vmatprep.subr.bf16.mxu0 0
  %1770 = vmatpush1.bf16.msra.mxu0 %v1649
  %1771 = vmatprep.mubr.bf16.mxu0 %v1377
  %1772 = vmatmul.mubr.bf16.gmra.mrb[0].mxu0 %v1376
  %v1773 = vpop.f32.mrb[0].mxu0
  %v1774 = vadd.f32 0.0, %v1773
  %v1775 = vpop.f32.mrb[0].mxu0
  %v1776 = vpop.f32.mrb[0].mxu0
  %v1777 = vpop.f32.mrb[0].mxu0
  %1778 = vdwg.mxu0
  %v1780 = vrot.slane %v1733, 6
  %1781 = vrot.lane.b32.xlu0 %v1780, 88
  %v1782 = vpop.permute.xlu0 %1781
  %v1784 = vrot.slane %v1733, 4
  %1785 = vrot.lane.b32.xlu0 %v1784, 48
  %v1786 = vpop.permute.xlu0 %1785
  %v1789 = vrot.slane %v1733, 2
  %v1790 = vrot.slane %v1735, 2
  %1791 = vrot.lane.b32.xlu0 %v1789, 8
  %v1792 = vpop.permute.xlu0 %1791
  %1793 = vrot.lane.b32.xlu0 %v1790, 8
  %v1794 = vpop.permute.xlu0 %1793
  %v1795 = vsel %vm123, %v1792, %v1794
  %1797 = vrot.lane.b32.xlu0 %v1735, 96
  %v1798 = vpop.permute.xlu0 %1797
  %v1800 = vrot.slane %v1735, 6
  %1801 = vrot.lane.b32.xlu0 %v1800, 56
  %v1802 = vpop.permute.xlu0 %1801
  %v1805 = vrot.slane %v1735, 4
  %v1806 = vrot.slane %v1774, 4
  %1807 = vrot.lane.b32.xlu0 %v1805, 16
  %v1808 = vpop.permute.xlu0 %1807
  %1809 = vrot.lane.b32.xlu0 %v1806, 16
  %v1810 = vpop.permute.xlu0 %1809
  %v1811 = vsel %vm38, %v1808, %v1810
  %v1813 = vrot.slane %v1774, 2
  %1814 = vrot.lane.b32.xlu0 %v1813, 104
  %v1815 = vpop.permute.xlu0 %1814
  %vm1817 = vcmask 1041408
  %v1818 = vsel %vm1817, %v1733, %v1782
  %vm1819 = vcmask 1043456
  %v1820 = vsel %vm1819, %v1818, %v1786
  %vm1821 = vcmask 1045504
  %v1822 = vsel %vm1821, %v1820, %v1795
  %v1823 = vsel %vm1817, %v1798, %v1802
  %v1824 = vsel %vm1819, %v1823, %v1811
  %v1825 = vsel %vm1821, %v1824, %v1815
  %1826 = vrot.lane.b32.xlu0 %v30, 96
  %v1827 = vpop.permute.xlu0 %1826
  %1828 = vrot.lane.b32.xlu0 %v31, 96
  %v1829 = vpop.permute.xlu0 %1828
  %v1830 = vsel %vm38, %v1827, 0
  %v1832 = vsel %vm38, %v1829, 0
  %1834 = vmatprep.subr.mxu0 0.0
  %1835 = vmatpush1.msra.mxu0 %v1822
  %1836 = vmatprep.subr.mxu0 0.0
  %1837 = vmatpush1.msra.mxu0 %v1825
  %1838 = vmatprep.subr.mxu0 0.0
  %1839 = vmatpush1.msra.mxu0 0.0
  %1840 = vmatprep.subr.mxu0 0.0
  %1841 = vmatpush1.msra.mxu0 0.0
  %1842 = vmatprep.subr.mxu0 0.0
  %1843 = vmatpush1.msra.mxu0 0.0
  %1844 = vmatprep.subr.mxu0 0.0
  %1845 = vmatpush1.msra.mxu0 0.0
  %1846 = vmatprep.subr.mxu0 0.0
  %1847 = vmatpush1.msra.mxu0 0.0
  %1848 = vmatprep.subr.mxu0 0.0
  %1849 = vmatpush1.msra.mxu0 0.0
  %1850 = vmatprep.subr.mxu0 0.0
  %1851 = vmatpush1.msra.mxu0 0.0
  %1852 = vmatprep.subr.mxu0 0.0
  %1853 = vmatpush1.msra.mxu0 0.0
  %1854 = vmatprep.subr.mxu0 0.0
  %1855 = vmatpush1.msra.mxu0 0.0
  %1856 = vmatprep.subr.mxu0 0.0
  %1857 = vmatpush1.msra.mxu0 0.0
  %1858 = vmatprep.subr.mxu0 0.0
  %1859 = vmatpush1.msra.mxu0 0.0
  %1860 = vmatprep.subr.mxu0 0.0
  %1861 = vmatpush1.msra.mxu0 0.0
  %1862 = vmatprep.subr.mxu0 0.0
  %1863 = vmatpush1.msra.mxu0 0.0
  %1864 = vmatprep.subr.mxu0 0.0
  %1865 = vmatpush1.msra.mxu0 0.0
  %1866 = vmatprep.subr.mxu0 0.0
  %1867 = vmatpush1.msra.mxu0 0.0
  %1868 = vmatprep.subr.mxu0 0.0
  %1869 = vmatpush1.msra.mxu0 0.0
  %1870 = vmatprep.subr.mxu0 0.0
  %1871 = vmatpush1.msra.mxu0 0.0
  %1872 = vmatprep.subr.mxu0 0.0
  %1873 = vmatpush1.msra.mxu0 0.0
  %1874 = vmatprep.subr.mxu0 0.0
  %1875 = vmatpush1.msra.mxu0 0.0
  %1876 = vmatprep.subr.mxu0 0.0
  %1877 = vmatpush1.msra.mxu0 0.0
  %1878 = vmatprep.subr.mxu0 0.0
  %1879 = vmatpush1.msra.mxu0 0.0
  %1880 = vmatprep.subr.mxu0 0.0
  %1881 = vmatpush1.msra.mxu0 0.0
  %1882 = vmatprep.subr.mxu0 0.0
  %1883 = vmatpush1.msra.mxu0 0.0
  %1884 = vmatprep.subr.mxu0 0.0
  %1885 = vmatpush1.msra.mxu0 0.0
  %1886 = vmatprep.subr.mxu0 0.0
  %1887 = vmatpush1.msra.mxu0 0.0
  %1888 = vmatprep.subr.mxu0 0.0
  %1889 = vmatpush1.msra.mxu0 0.0
  %1890 = vmatprep.subr.mxu0 0.0
  %1891 = vmatpush1.msra.mxu0 0.0
  %1892 = vmatprep.subr.mxu0 0.0
  %1893 = vmatpush1.msra.mxu0 0.0
  %1894 = vmatprep.subr.mxu0 0.0
  %1895 = vmatpush1.msra.mxu0 0.0
  %1896 = vmatprep.subr.mxu0 0.0
  %1897 = vmatpush1.msra.mxu0 0.0
  %1898 = vmatprep.mubr.f32.mxu0 0.0
  %1899 = vmatmul.mubr.f32.gmra.mrb[0].mxu0 %v1830
  %v1900 = vpop.f32.mrb[0].mxu0
  %v1901 = vadd.f32 0.0, %v1900
  %v1902 = vpop.f32.mrb[0].mxu0
  %1903 = vmatprep.mubr.f32.mxu0 0.0
  %1904 = vmatmul.mubr.f32.gmra.mrb[0].mxu0 %v1832
  %v1905 = vpop.f32.mrb[0].mxu0
  %v1906 = vadd.f32 0.0, %v1905
  %v1907 = vpop.f32.mrb[0].mxu0
  %1908 = vdwg.mxu0
  %vm1909 = vcmask 326656
  %v1910 = vsel %vm1909, %v1901, 0.0
  %1911 = vadd.xlane.f32.xlu0 %v1910
  %v1912 = vpop.xlane.xlu0 %1911
  %v1913 = vsel %vm1909, %v1906, 0.0
  %1914 = vadd.xlane.f32.xlu0 %v1913
  %v1915 = vpop.xlane.xlu0 %1914
  %v1916 = vmul.f32 %v1901, %v1901
  %v1917 = vmul.f32 %v1906, %v1906
  %v1918 = vsel %vm1909, %v1916, 0.0
  %1919 = vadd.xlane.f32.xlu0 %v1918
  %v1920 = vpop.xlane.xlu0 %1919
  %v1921 = vsel %vm1909, %v1917, 0.0
  %1922 = vadd.xlane.f32.xlu0 %v1921
  %v1923 = vpop.xlane.xlu0 %1922
  %v1924 = vsel %vm121, %v1912, %v1920
  %v1925 = vsel %vm121, %v1915, %v1923
  %1926 = vmatprep.subr.mxu0 0.0
  %1927 = vmatpush1.msra.mxu0 %v1924
  %1928 = vmatprep.subr.mxu0 0.0
  %1929 = vmatpush1.msra.mxu0 %v1925
  %1930 = vmatprep.subr.mxu0 0.0
  %1931 = vmatpush1.msra.mxu0 0.0
  %1932 = vmatprep.subr.mxu0 0.0
  %1933 = vmatpush1.msra.mxu0 0.0
  %1934 = vmatprep.subr.mxu0 0.0
  %1935 = vmatpush1.msra.mxu0 0.0
  %1936 = vmatprep.subr.mxu0 0.0
  %1937 = vmatpush1.msra.mxu0 0.0
  %1938 = vmatprep.subr.mxu0 0.0
  %1939 = vmatpush1.msra.mxu0 0.0
  %1940 = vmatprep.subr.mxu0 0.0
  %1941 = vmatpush1.msra.mxu0 0.0
  %1942 = vmatprep.subr.mxu0 0.0
  %1943 = vmatpush1.msra.mxu0 0.0
  %1944 = vmatprep.subr.mxu0 0.0
  %1945 = vmatpush1.msra.mxu0 0.0
  %1946 = vmatprep.subr.mxu0 0.0
  %1947 = vmatpush1.msra.mxu0 0.0
  %1948 = vmatprep.subr.mxu0 0.0
  %1949 = vmatpush1.msra.mxu0 0.0
  %1950 = vmatprep.subr.mxu0 0.0
  %1951 = vmatpush1.msra.mxu0 0.0
  %1952 = vmatprep.subr.mxu0 0.0
  %1953 = vmatpush1.msra.mxu0 0.0
  %1954 = vmatprep.subr.mxu0 0.0
  %1955 = vmatpush1.msra.mxu0 0.0
  %1956 = vmatprep.subr.mxu0 0.0
  %1957 = vmatpush1.msra.mxu0 0.0
  %1958 = vmatprep.subr.mxu0 0.0
  %1959 = vmatpush1.msra.mxu0 0.0
  %1960 = vmatprep.subr.mxu0 0.0
  %1961 = vmatpush1.msra.mxu0 0.0
  %1962 = vmatprep.subr.mxu0 0.0
  %1963 = vmatpush1.msra.mxu0 0.0
  %1964 = vmatprep.subr.mxu0 0.0
  %1965 = vmatpush1.msra.mxu0 0.0
  %1966 = vmatprep.subr.mxu0 0.0
  %1967 = vmatpush1.msra.mxu0 0.0
  %1968 = vmatprep.subr.mxu0 0.0
  %1969 = vmatpush1.msra.mxu0 0.0
  %1970 = vmatprep.subr.mxu0 0.0
  %1971 = vmatpush1.msra.mxu0 0.0
  %1972 = vmatprep.subr.mxu0 0.0
  %1973 = vmatpush1.msra.mxu0 0.0
  %1974 = vmatprep.subr.mxu0 0.0
  %1975 = vmatpush1.msra.mxu0 0.0
  %1976 = vmatprep.subr.mxu0 0.0
  %1977 = vmatpush1.msra.mxu0 0.0
  %1978 = vmatprep.subr.mxu0 0.0
  %1979 = vmatpush1.msra.mxu0 0.0
  %1980 = vmatprep.subr.mxu0 0.0
  %1981 = vmatpush1.msra.mxu0 0.0
  %1982 = vmatprep.subr.mxu0 0.0
  %1983 = vmatpush1.msra.mxu0 0.0
  %1984 = vmatprep.subr.mxu0 0.0
  %1985 = vmatpush1.msra.mxu0 0.0
  %1986 = vmatprep.subr.mxu0 0.0
  %1987 = vmatpush1.msra.mxu0 0.0
  %1988 = vmatprep.subr.mxu0 0.0
  %1989 = vmatpush1.msra.mxu0 0.0
  %1990 = vmatprep.mubr.f32.mxu0 0.0
  %1991 = vmatmul.mubr.f32.gmra.mrb[0].mxu0 %v902
  %v1992 = vpop.f32.mrb[0].mxu0
  %v1993 = vadd.f32 0.0, %v1992
  %v1994 = vpop.f32.mrb[0].mxu0
  %1995 = vmatprep.mubr.f32.mxu0 0.0
  %1996 = vmatmul.mubr.f32.gmra.mrb[0].mxu0 %v904
  %v1997 = vpop.f32.mrb[0].mxu0
  %v1998 = vadd.f32 0.0, %v1997
  %v1999 = vpop.f32.mrb[0].mxu0
  %2000 = vdwg.mxu0
  %v2001 = vmul.f32 %v1993, 0.0125
  %v2002 = vmul.f32 %v1998, 0.0125
  %v2003 = vmul.f32 %v2001, %v2001
  %v2004 = vmul.f32 %v2002, %v2002
  %2007 = vrot.lane.b32.xlu0 %v2003, 1
  %v2008 = vpop.permute.xlu0 %2007
  %2009 = vrot.lane.b32.xlu0 %v2004, 1
  %v2010 = vpop.permute.xlu0 %2009
  %v2013 = vsub.f32 %v2001, %v2008
  %v2014 = vsub.f32 %v2002, %v2010
  %v2015 = vadd.f32 %v2013, 1e-05
  %v2016 = vadd.f32 %v2014, 1e-05
  %v2017 = vrsqrt.pop %v2015
  %v2018 = vrsqrt.pop %v2016
  %2021 = vrot.lane.b32.xlu0 %v2017, 27
  %v2022 = vpop.permute.xlu0 %2021
  %2023 = vrot.lane.b32.xlu0 %v2018, 27
  %v2024 = vpop.permute.xlu0 %2023
  %v2027 = vmul.f32 %v32, %v2022
  %v2028 = vmul.f32 %v33, %v2024
  %2031 = vrot.lane.b32.xlu0 %v2027, 100
  %v2032 = vpop.permute.xlu0 %2031
  %2033 = vrot.lane.b32.xlu0 %v2028, 100
  %v2034 = vpop.permute.xlu0 %2033
  %v2037 = vmul.f32 %v2001, %v2032
  %v2038 = vmul.f32 %v2002, %v2034
  %2041 = vrot.lane.b32.xlu0 %v2037, 29
  %v2042 = vpop.permute.xlu0 %2041
  %2043 = vrot.lane.b32.xlu0 %v2038, 29
  %v2044 = vpop.permute.xlu0 %2043
  %v2047 = vsub.f32 %v32, %v2042
  %v2048 = vsub.f32 %v33, %v2044
  %2049 = vset.pattern.permute.xlu0 28
  %2050 = vperm.xlu0 %2049, %v2027
  %v2051 = vpop.permute.xlu0 %2050
  %2053 = vset.pattern.permute.xlu0 28
  %2054 = vperm.xlu0 %2053, %v2028
  %v2055 = vpop.permute.xlu0 %2054
  %v2057 = vmul.f32 %v1901, %v2051
  %v2058 = vmul.f32 %v1906, %v2055
  %2060 = vset.pattern.permute.xlu0 29
  %2061 = vperm.xlu0 %2060, %v2047
  %v2062 = vpop.permute.xlu0 %2061
  %2065 = vset.pattern.permute.xlu0 29
  %2066 = vperm.xlu0 %2065, %v2048
  %v2067 = vpop.permute.xlu0 %2066
  %v2069 = vadd.f32 %v2057, %v2062
  %v2070 = vadd.f32 %v2058, %v2067
  %v2071 = vmax.f32 %v2069, 0.0
  %v2072 = vmax.f32 %v2070, 0.0
  %v2073 = vpack.c.bf16 %v2071, %v2071
  %v2074 = vld [vmem:[%s6] sm:$0xff]
  %v2075 = vld [vmem:[%s6 + $0x8] sm:$0xff]
  %v2076 = vld [vmem:[%s6 + $0x10] sm:$0xff]
  %v2077 = vld [vmem:[%s6 + $0x18] sm:$0xff]
  %v2078 = vld [vmem:[%s6 + $0x20] sm:$0xff]
  %v2079 = vpack.c.bf16 %v2072, %v2072
  %v2080 = vld [vmem:[%s7] sm:$0xff]
  %v2081 = vld [vmem:[%s7 + $0x8] sm:$0xff]
  %v2082 = vld [vmem:[%s7 + $0x10] sm:$0xff]
  %v2083 = vld [vmem:[%s7 + $0x18] sm:$0xff]
  %v2084 = vld [vmem:[%s7 + $0x20] sm:$0xff]
  %v2090 = vunpack.c.l.b16 %v2080
  %v2091 = vunpack.c.h.b16 %v2080
  %v2092 = vunpack.c.l.b16 %v2081
  %v2093 = vunpack.c.h.b16 %v2081
  %v2094 = vunpack.c.l.b16 %v2082
  %v2095 = vunpack.c.h.b16 %v2082
  %v2096 = vunpack.c.l.b16 %v2083
  %v2097 = vunpack.c.h.b16 %v2083
  %v2098 = vunpack.c.l.b16 %v2084
  %v2099 = vunpack.c.h.b16 %v2084
  %v2100 = vpack.c.b16 %v2092, %v2090
  %v2101 = vpack.c.b16 %v2093, %v2091
  %v2102 = vpack.c.b16 %v2096, %v2094
  %v2103 = vpack.c.b16 %v2097, %v2095
  %v2104 = vpack.c.b16 %v2098, %v2098
  %v2105 = vpack.c.b16 %v2099, %v2099
  %v2111 = vsel %vm1909, %v2079, 0
  %v2114 = vsel %vm1819, %v2104, 0
  %v2117 = vsel %vm1819, %v2105, 0
  %2119 = vmatprep.subr.bf16.mxu0 %v2101
  %2120 = vmatpush1.bf16.msra.mxu0 %v2100
  %2121 = vmatprep.subr.bf16.mxu0 %v2103
  %2122 = vmatpush1.bf16.msra.mxu0 %v2102
  %2123 = vmatprep.subr.bf16.mxu0 %v2117
  %2124 = vmatpush1.bf16.msra.mxu0 %v2114
  %2125 = vmatprep.subr.bf16.mxu0 0
  %2126 = vmatpush1.bf16.msra.mxu0 0
  %2127 = vmatprep.subr.bf16.mxu0 0
  %2128 = vmatpush1.bf16.msra.mxu0 0
  %2129 = vmatprep.subr.bf16.mxu0 0
  %2130 = vmatpush1.bf16.msra.mxu0 0
  %2131 = vmatprep.subr.bf16.mxu0 0
  %2132 = vmatpush1.bf16.msra.mxu0 0
  %2133 = vmatprep.subr.bf16.mxu0 0
  %2134 = vmatpush1.bf16.msra.mxu0 0
  %2135 = vmatprep.subr.bf16.mxu0 0
  %2136 = vmatpush1.bf16.msra.mxu0 0
  %2137 = vmatprep.subr.bf16.mxu0 0
  %2138 = vmatpush1.bf16.msra.mxu0 0
  %2139 = vmatprep.subr.bf16.mxu0 0
  %2140 = vmatpush1.bf16.msra.mxu0 0
  %2141 = vmatprep.subr.bf16.mxu0 0
  %2142 = vmatpush1.bf16.msra.mxu0 0
  %2143 = vmatprep.subr.bf16.mxu0 0
  %2144 = vmatpush1.bf16.msra.mxu0 0
  %2145 = vmatprep.subr.bf16.mxu0 0
  %2146 = vmatpush1.bf16.msra.mxu0 0
  %2147 = vmatprep.subr.bf16.mxu0 0
  %2148 = vmatpush1.bf16.msra.mxu0 0
  %2149 = vmatprep.subr.bf16.mxu0 0
  %2150 = vmatpush1.bf16.msra.mxu0 0
  %2151 = vmatprep.mubr.bf16.mxu0 0
  %2152 = vmatmul.mubr.bf16.gmra.mrb[0].mxu0 %v2111
  %v2153 = vpop.f32.mrb[0].mxu0
  %v2154 = vadd.f32 0.0, %v2153
  %v2155 = vpop.f32.mrb[0].mxu0
  %v2156 = vadd.f32 0.0, %v2155
  %v2157 = vpop.f32.mrb[0].mxu0
  %v2158 = vpop.f32.mrb[0].mxu0
  %2159 = vdwg.mxu0
  %v2165 = vunpack.c.l.b16 %v2074
  %v2166 = vunpack.c.h.b16 %v2074
  %v2167 = vunpack.c.l.b16 %v2075
  %v2168 = vunpack.c.h.b16 %v2075
  %v2169 = vunpack.c.l.b16 %v2076
  %v2170 = vunpack.c.h.b16 %v2076
  %v2171 = vunpack.c.l.b16 %v2077
  %v2172 = vunpack.c.h.b16 %v2077
  %v2173 = vunpack.c.l.b16 %v2078
  %v2174 = vunpack.c.h.b16 %v2078
  %v2175 = vpack.c.b16 %v2167, %v2165
  %v2176 = vpack.c.b16 %v2168, %v2166
  %v2177 = vpack.c.b16 %v2171, %v2169
  %v2178 = vpack.c.b16 %v2172, %v2170
  %v2179 = vpack.c.b16 %v2173, %v2173
  %v2180 = vpack.c.b16 %v2174, %v2174
  %v2186 = vsel %vm1909, %v2073, 0
  %v2189 = vsel %vm1819, %v2179, 0
  %v2192 = vsel %vm1819, %v2180, 0
  %2194 = vmatprep.subr.bf16.mxu0 %v2176
  %2195 = vmatpush1.bf16.msra.mxu0 %v2175
  %2196 = vmatprep.subr.bf16.mxu0 %v2178
  %2197 = vmatpush1.bf16.msra.mxu0 %v2177
  %2198 = vmatprep.subr.bf16.mxu0 %v2192
  %2199 = vmatpush1.bf16.msra.mxu0 %v2189
  %2200 = vmatprep.subr.bf16.mxu0 0
  %2201 = vmatpush1.bf16.msra.mxu0 0
  %2202 = vmatprep.subr.bf16.mxu0 0
  %2203 = vmatpush1.bf16.msra.mxu0 0
  %2204 = vmatprep.subr.bf16.mxu0 0
  %2205 = vmatpush1.bf16.msra.mxu0 0
  %2206 = vmatprep.subr.bf16.mxu0 0
  %2207 = vmatpush1.bf16.msra.mxu0 0
  %2208 = vmatprep.subr.bf16.mxu0 0
  %2209 = vmatpush1.bf16.msra.mxu0 0
  %2210 = vmatprep.subr.bf16.mxu0 0
  %2211 = vmatpush1.bf16.msra.mxu0 0
  %2212 = vmatprep.subr.bf16.mxu0 0
  %2213 = vmatpush1.bf16.msra.mxu0 0
  %2214 = vmatprep.subr.bf16.mxu0 0
  %2215 = vmatpush1.bf16.msra.mxu0 0
  %2216 = vmatprep.subr.bf16.mxu0 0
  %2217 = vmatpush1.bf16.msra.mxu0 0
  %2218 = vmatprep.subr.bf16.mxu0 0
  %2219 = vmatpush1.bf16.msra.mxu0 0
  %2220 = vmatprep.subr.bf16.mxu0 0
  %2221 = vmatpush1.bf16.msra.mxu0 0
  %2222 = vmatprep.subr.bf16.mxu0 0
  %2223 = vmatpush1.bf16.msra.mxu0 0
  %2224 = vmatprep.subr.bf16.mxu0 0
  %2225 = vmatpush1.bf16.msra.mxu0 0
  %2226 = vmatprep.mubr.bf16.mxu0 0
  %2227 = vmatmul.mubr.bf16.gmra.mrb[0].mxu0 %v2186
  %v2228 = vpop.f32.mrb[0].mxu0
  %v2229 = vadd.f32 %v2154, %v2228
  %v2230 = vpop.f32.mrb[0].mxu0
  %v2231 = vadd.f32 %v2156, %v2230
  %v2232 = vpop.f32.mrb[0].mxu0
  %v2233 = vpop.f32.mrb[0].mxu0
  %2234 = vdwg.mxu0
  %v2235 = vadd.f32 %v234, %v1361
  %v2236 = vadd.f32 %v235, %v1363
  %v2237 = vadd.f32 %v2235, %v2229
  %v2238 = vadd.f32 %v2236, %v2231
  %2239 = vrot.lane.b32.xlu0 %v30, 80
  %v2240 = vpop.permute.xlu0 %2239
  %2241 = vrot.lane.b32.xlu0 %v31, 80
  %v2242 = vpop.permute.xlu0 %2241
  %v2243 = vsel %vm123, %v2240, 0
  %v2245 = vsel %vm123, %v2242, 0
  %2247 = vmatprep.subr.mxu0 %v2238
  %2248 = vmatpush1.msra.mxu0 %v2237
  %2249 = vmatprep.subr.mxu0 0.0
  %2250 = vmatpush1.msra.mxu0 0.0
  %2251 = vmatprep.subr.mxu0 0.0
  %2252 = vmatpush1.msra.mxu0 0.0
  %2253 = vmatprep.subr.mxu0 0.0
  %2254 = vmatpush1.msra.mxu0 0.0
  %2255 = vmatprep.subr.mxu0 0.0
  %2256 = vmatpush1.msra.mxu0 0.0
  %2257 = vmatprep.subr.mxu0 0.0
  %2258 = vmatpush1.msra.mxu0 0.0
  %2259 = vmatprep.subr.mxu0 0.0
  %2260 = vmatpush1.msra.mxu0 0.0
  %2261 = vmatprep.subr.mxu0 0.0
  %2262 = vmatpush1.msra.mxu0 0.0
  %2263 = vmatprep.subr.mxu0 0.0
  %2264 = vmatpush1.msra.mxu0 0.0
  %2265 = vmatprep.subr.mxu0 0.0
  %2266 = vmatpush1.msra.mxu0 0.0
  %2267 = vmatprep.subr.mxu0 0.0
  %2268 = vmatpush1.msra.mxu0 0.0
  %2269 = vmatprep.subr.mxu0 0.0
  %2270 = vmatpush1.msra.mxu0 0.0
  %2271 = vmatprep.subr.mxu0 0.0
  %2272 = vmatpush1.msra.mxu0 0.0
  %2273 = vmatprep.subr.mxu0 0.0
  %2274 = vmatpush1.msra.mxu0 0.0
  %2275 = vmatprep.subr.mxu0 0.0
  %2276 = vmatpush1.msra.mxu0 0.0
  %2277 = vmatprep.subr.mxu0 0.0
  %2278 = vmatpush1.msra.mxu0 0.0
  %2279 = vmatprep.subr.mxu0 0.0
  %2280 = vmatpush1.msra.mxu0 0.0
  %2281 = vmatprep.subr.mxu0 0.0
  %2282 = vmatpush1.msra.mxu0 0.0
  %2283 = vmatprep.subr.mxu0 0.0
  %2284 = vmatpush1.msra.mxu0 0.0
  %2285 = vmatprep.subr.mxu0 0.0
  %2286 = vmatpush1.msra.mxu0 0.0
  %2287 = vmatprep.subr.mxu0 0.0
  %2288 = vmatpush1.msra.mxu0 0.0
  %2289 = vmatprep.subr.mxu0 0.0
  %2290 = vmatpush1.msra.mxu0 0.0
  %2291 = vmatprep.subr.mxu0 0.0
  %2292 = vmatpush1.msra.mxu0 0.0
  %2293 = vmatprep.subr.mxu0 0.0
  %2294 = vmatpush1.msra.mxu0 0.0
  %2295 = vmatprep.subr.mxu0 0.0
  %2296 = vmatpush1.msra.mxu0 0.0
  %2297 = vmatprep.subr.mxu0 0.0
  %2298 = vmatpush1.msra.mxu0 0.0
  %2299 = vmatprep.subr.mxu0 0.0
  %2300 = vmatpush1.msra.mxu0 0.0
  %2301 = vmatprep.subr.mxu0 0.0
  %2302 = vmatpush1.msra.mxu0 0.0
  %2303 = vmatprep.subr.mxu0 0.0
  %2304 = vmatpush1.msra.mxu0 0.0
  %2305 = vmatprep.subr.mxu0 0.0
  %2306 = vmatpush1.msra.mxu0 0.0
  %2307 = vmatprep.subr.mxu0 0.0
  %2308 = vmatpush1.msra.mxu0 0.0
  %2309 = vmatprep.subr.mxu0 0.0
  %2310 = vmatpush1.msra.mxu0 0.0
  %2311 = vmatprep.mubr.f32.mxu0 0.0
  %2312 = vmatmul.mubr.f32.gmra.mrb[0].mxu0 %v2243
  %v2313 = vpop.f32.mrb[0].mxu0
  %v2314 = vadd.f32 0.0, %v2313
  %v2315 = vpop.f32.mrb[0].mxu0
  %v2316 = vadd.f32 0.0, %v2315
  %2317 = vmatprep.mubr.f32.mxu0 0.0
  %2318 = vmatmul.mubr.f32.gmra.mrb[0].mxu0 %v2245
  %v2319 = vpop.f32.mrb[0].mxu0
  %v2320 = vadd.f32 0.0, %v2319
  %v2321 = vpop.f32.mrb[0].mxu0
  %v2322 = vadd.f32 0.0, %v2321
  %2323 = vdwg.mxu0
  %2324 = vst [vmem:[%s8] sm:$0xff] %v2314
  %2325 = vst [vmem:[%s8 + $0x8] sm:$0xff] %v2316
  %2326 = vst [vmem:[%s8 + $0x10] sm:$0xff] %v2320
  %2327 = vst [vmem:[%s8 + $0x18] sm:$0xff] %v2322
  // Predicated region
  $region34: #{spectral_transform_forward.1} parent=0 // pred_check
    _
  $region35: #{spectral_transform_forward.1} parent=0 // pred_check_branch
    %2329 = sbr.rel (0) target = $region37
  $region36: #{spectral_transform_forward.1} parent=0 // pred_region
    _
  $region37: #{spectral_transform_forward.1} parent=0 // pred_fallthru
    _
  // Predicated region
  $region38: #{spectral_transform_forward.1} parent=0 // pred_check
    _
  $region39: #{spectral_transform_forward.1} parent=0 // pred_check_branch
    %2331 = sbr.rel (0) target = $region41
  $region40: #{spectral_transform_forward.1} parent=0 // pred_region
    _
  $region41: #{spectral_transform_forward.1} parent=0 // pred_fallthru
    _

</llo_original>
